<compile_context>
chip_gen: v6e
topology: v6e:2x2x1
jax: 0.10.0
libtpu: 0.0.40
codegen_flags: <defaults>
</compile_context>

<pallas_src>
import functools

import numpy as np

import jax
import jax.numpy as jnp
from jax import lax
from jax.experimental import pallas as pl
from jax.experimental.pallas import tpu as pltpu

_BN_EPS = 1e-5  # PyTorch nn.BatchNorm2d default


# ----------------------------------------------------------------------------
# Fused kernel
# ----------------------------------------------------------------------------
def _decoder_block_kernel(xin_ref, band1_ref, g1_ref, be1_ref,
                          band2_ref, g2_ref, be2_ref,
                          pavg_ref, bdup_ref, brup_ref,
                          y2_ref, yup_ref,
                          xpad, y1pad, *, pad1, k1):
    """Fused conv1+BN1+ReLU -> conv2+BN2+ReLU -> 1x1 reduce -> 2x upsample.

    xin_ref  : (N, H, W*Cin)             input row-slab (x ++ skip on channels)
    band1_ref: (k1, W*Cin, Wo*Cout)      banded conv1 weights (kw taps + W pad folded in)
    band2_ref: (3,  Wo*Cout, Wo*Cout)    banded conv2 weights (3x3, pad 1)
    g*_ref, be*_ref : (1, Wo*Cout)       BN gamma/beta, pre-tiled to lane width
    pavg_ref : (Wo*Cout, Wo*Cout)        per-channel group-average matrix (incl. 1/npix)
    bdup_ref : (Wo*Cout, 2*Wo*Cr)        block-diag 1x1-reduce weight, width-dup folded in
    brup_ref : (1, 2*Wo*Cr)              reduce bias, pre-tiled to 2*Wo lanes
    y2_ref   : (N*Ho, Wo*Cout)           lane-dense output slab (relu(bn2(conv2(...))))
    yup_ref  : (N*Ho, 2, 2*Wo*Cr)        lane-dense, fully upsampled reduce output
    xpad, y1pad : VMEM scratch, H-zero-padded row slabs.
    """
    f32 = jnp.float32
    N, H, WC = xin_ref.shape
    Ho = H + 2 * pad1 - k1 + 1
    L = band1_ref.shape[2]                      # Wo * Cout

    def band_conv(src_pad, bands, taps):
        # one [N*Ho, W*C] x [W*C, Wo*Cout] MXU matmul per kh tap row
        acc = jnp.dot(src_pad[:, 0:Ho, :].reshape(N * Ho, -1), bands[0],
                      preferred_element_type=f32)
        for kh in range(1, taps):
            acc = acc + jnp.dot(src_pad[:, kh:kh + Ho, :].reshape(N * Ho, -1),
                                bands[kh], preferred_element_type=f32)
        return acc

    def bn_relu(acc, gamma_l, beta_l):
        # training-mode BN, one-pass stats (sum and sum-of-squares).
        # Column sums (sublane reduce, XLU) first, then the per-channel group
        # reduce + lane broadcast via a tiny (1,L)x(L,L) MXU matmul so the
        # whole epilogue stays on the lane-dense (N*Ho, Wo*Cout) slab.
        # (conv bias is omitted: BN mean subtraction cancels it exactly)
        colsum = jnp.sum(acc, axis=0, keepdims=True)                  # (1, L)
        colsq = jnp.sum(acc * acc, axis=0, keepdims=True)             # (1, L)
        mean_l = jnp.dot(colsum, pavg_ref[...], preferred_element_type=f32)
        msq_l = jnp.dot(colsq, pavg_ref[...], preferred_element_type=f32)
        var_l = msq_l - mean_l * mean_l
        scale_l = gamma_l * lax.rsqrt(var_l + _BN_EPS)
        shift_l = beta_l - mean_l * scale_l
        return jnp.maximum(acc * scale_l + shift_l, 0.0)

    # ---- stage 0: H zero-padding inside VMEM (W padding lives in the bands) ----
    if pad1 > 0:
        xpad[:, 0:pad1, :] = jnp.zeros((N, pad1, WC), xpad.dtype)
        xpad[:, pad1 + H:pad1 + H + pad1, :] = jnp.zeros((N, pad1, WC), xpad.dtype)
    xpad[:, pad1:pad1 + H, :] = xin_ref[...]

    # ---- stage 1: conv1 + BN1 + ReLU ----
    y1 = bn_relu(band_conv(xpad, band1_ref, k1), g1_ref[...], be1_ref[...])

    # ---- stage 2: conv2 (3x3, pad 1) + BN2 + ReLU; y1 stays in VMEM ----
    y1pad[:, 0:1, :] = jnp.zeros((N, 1, L), y1pad.dtype)
    y1pad[:, 1 + Ho:2 + Ho, :] = jnp.zeros((N, 1, L), y1pad.dtype)
    y1pad[:, 1:1 + Ho, :] = y1.reshape(N, Ho, L).astype(y1pad.dtype)
    y2 = bn_relu(band_conv(y1pad, band2_ref, 3), g2_ref[...], be2_ref[...])
    y2_ref[...] = y2.astype(y2_ref.dtype)       # lane-dense (N*Ho, Wo*Cout) store

    # ---- stage 3: 1x1 reduce (+bias) with the 2x width repeat folded into the
    #      block-diag weight; 2x height repeat = two sublane stores of the row.
    yup = jnp.dot(y2, bdup_ref[...], preferred_element_type=f32) + brup_ref[...]
    yup3 = yup.reshape(N * Ho, 1, yup.shape[1]).astype(yup_ref.dtype)
    yup_ref[:, 0:1, :] = yup3
    yup_ref[:, 1:2, :] = yup3


# ----------------------------------------------------------------------------
# Wrapper-side weight re-packing (runs once per trace)
# ----------------------------------------------------------------------------
def _band_indicator(w_len, k, pad, out_len):
    """M[x, q, u] = 1  iff input col x feeds output col u through tap q (stride 1)."""
    m = np.zeros((w_len, k, out_len), np.float32)
    for u in range(out_len):
        for q in range(k):
            x = u + q - pad
            if 0 <= x < w_len:
                m[x, q, u] = 1.0
    return m


def _make_bands(w_hwio, w_len, out_len, pad):
    """(KH, W*Cin, Wo*Cout) banded weights: kw taps + W zero-padding folded in."""
    kh_sz, kw_sz, cin, cout = w_hwio.shape
    m = jnp.asarray(_band_indicator(w_len, kw_sz, pad, out_len))      # (W, KW, Wo)
    band = jnp.einsum("xqu,kqio->kxiuo", m, w_hwio)                   # (KH, W, Cin, Wo, Cout)
    return band.reshape(kh_sz, w_len * cin, out_len * cout)


def _make_blockdiag_up(wr, wo):
    """(Wo*Cout, 2*Wo*Cr) block-diag 1x1-reduce weight with 2x width repeat folded in."""
    cout, cr = wr.shape
    dup = jnp.repeat(jnp.eye(wo, dtype=wr.dtype), 2, axis=1)          # (Wo, 2*Wo)
    return jnp.einsum("uv,cr->ucvr", dup, wr).reshape(wo * cout, 2 * wo * cr)


# ----------------------------------------------------------------------------
# DecoderBlock forward (NCHW in / NCHW out, like the PyTorch module)
# ----------------------------------------------------------------------------
def decoder_block_forward(params, x_nchw, skip_nchw, padding):
    # NCHW -> NHWC, channel concat, merge (W, C) into the lane axis  (XLA glue)
    x = jnp.transpose(x_nchw, (0, 2, 3, 1))
    skip = jnp.transpose(skip_nchw, (0, 2, 3, 1))
    xin = jnp.concatenate([x, skip], axis=-1)
    N, H, W, Cin = xin.shape
    KH, KW, _, Cout = params["w1"].shape
    Ho = H + 2 * padding - KH + 1
    Wo = W + 2 * padding - KW + 1
    Cr = params["wr"].shape[-1]
    xin_slab = xin.reshape(N, H, W * Cin)

    # weight re-packing: banded conv weights, block-diag reduce (+width dup), BN tiles
    band1 = _make_bands(params["w1"], W, Wo, padding)                 # (KH, W*Cin, Wo*Cout)
    band2 = _make_bands(params["w2"], Wo, Wo, 1)                      # (3, Wo*Cout, Wo*Cout)
    bd_up = _make_blockdiag_up(params["wr"], Wo)                      # (Wo*Cout, 2*Wo*Cr)
    br_up = jnp.tile(params["br"].reshape(1, Cr), (1, 2 * Wo))        # (1, 2*Wo*Cr)
    g1l = jnp.tile(params["g1"].reshape(1, Cout), (1, Wo))
    be1l = jnp.tile(params["be1"].reshape(1, Cout), (1, Wo))
    g2l = jnp.tile(params["g2"].reshape(1, Cout), (1, Wo))
    be2l = jnp.tile(params["be2"].reshape(1, Cout), (1, Wo))
    # per-channel group-average matrix (also carries 1/npix for the BN mean)
    pavg = jnp.tile(jnp.eye(Cout, dtype=jnp.float32), (Wo, Wo)) / float(N * Ho * Wo)

    vmem = pl.BlockSpec(memory_space=pltpu.MemorySpace.VMEM)
    kernel = functools.partial(_decoder_block_kernel, pad1=padding, k1=KH)

    # TODO(synk): for production shapes, add a grid over N*Ho row blocks with
    # dimension_semantics=('parallel',) (v7x dual-TC) and a cross-tile BN reduce.
    y2_slab, yup_slab = pl.pallas_call(
        kernel,
        out_shape=(jax.ShapeDtypeStruct((N * Ho, Wo * Cout), x.dtype),
                   jax.ShapeDtypeStruct((N * Ho, 2, 2 * Wo * Cr), x.dtype)),
        in_specs=[vmem] * 10,
        out_specs=(vmem, vmem),
        scratch_shapes=[
            pltpu.VMEM((N, H + 2 * padding, W * Cin), x.dtype),   # H-padded input slab
            pltpu.VMEM((N, Ho + 2, Wo * Cout), x.dtype),          # H-padded y1 slab
        ],
    )(xin_slab, band1, g1l, be1l, band2, g2l, be2l, pavg, bd_up, br_up)

    # slabs -> NHWC -> NCHW  (pure data movement / XLA glue; upsample already done)
    y2 = y2_slab.reshape(N, Ho, Wo, Cout)
    y_up = yup_slab.reshape(N, 2 * Ho, 2 * Wo, Cr)
    return (jnp.transpose(y2, (0, 3, 1, 2)), jnp.transpose(y_up, (0, 3, 1, 2)))


# ----------------------------------------------------------------------------
# Deterministic parameter init (shapes follow the module's __init__)
# ----------------------------------------------------------------------------
def init_params(key, in_channels, out_channels, kernel_size):
    ks = jax.random.split(key, 10)
    s = 0.1
    return dict(
        w1=s * jax.random.normal(ks[0], (kernel_size, kernel_size, in_channels, out_channels), jnp.float32),
        b1=s * jax.random.normal(ks[1], (out_channels,), jnp.float32),
        g1=1.0 + 0.05 * jax.random.normal(ks[2], (out_channels,), jnp.float32),
        be1=s * jax.random.normal(ks[3], (out_channels,), jnp.float32),
        w2=s * jax.random.normal(ks[4], (3, 3, out_channels, out_channels), jnp.float32),
        b2=s * jax.random.normal(ks[5], (out_channels,), jnp.float32),
        g2=1.0 + 0.05 * jax.random.normal(ks[6], (out_channels,), jnp.float32),
        be2=s * jax.random.normal(ks[7], (out_channels,), jnp.float32),
        wr=s * jax.random.normal(ks[8], (out_channels, out_channels // 2), jnp.float32),
        br=s * jax.random.normal(ks[9], (out_channels // 2,), jnp.float32),
    )


# ----------------------------------------------------------------------------
# Pure-JAX reference for verification (includes the conv biases — they are
# cancelled by training-mode BN, which the kernel exploits by dropping them)
# ----------------------------------------------------------------------------
def _ref_conv(x, w, b, padding):
    return lax.conv_general_dilated(
        x, w, window_strides=(1, 1),
        padding=[(padding, padding), (padding, padding)],
        dimension_numbers=("NHWC", "HWIO", "NHWC")) + b


def _ref_bn_relu(x, gamma, beta):
    mean = jnp.mean(x, axis=(0, 1, 2), keepdims=True)
    var = jnp.mean((x - mean) ** 2, axis=(0, 1, 2), keepdims=True)
    return jnp.maximum((x - mean) / jnp.sqrt(var + _BN_EPS) * gamma + beta, 0.0)


def reference_forward(params, x_nchw, skip_nchw, padding):
    x = jnp.transpose(x_nchw, (0, 2, 3, 1))
    skip = jnp.transpose(skip_nchw, (0, 2, 3, 1))
    xin = jnp.concatenate([x, skip], axis=-1)
    y1 = _ref_bn_relu(_ref_conv(xin, params["w1"], params["b1"], padding),
                      params["g1"], params["be1"])
    y2 = _ref_bn_relu(_ref_conv(y1, params["w2"], params["b2"], 1),
                      params["g2"], params["be2"])
    yr = jnp.einsum("nhwc,cd->nhwd", y2, params["wr"]) + params["br"]
    y_up = jnp.repeat(jnp.repeat(yr, 2, axis=1), 2, axis=2)
    return (jnp.transpose(y2, (0, 3, 1, 2)), jnp.transpose(y_up, (0, 3, 1, 2)))


# ----------------------------------------------------------------------------
if __name__ == "__main__":
    # batch=2, x has 4 channels, skip has 4 channels -> in_channels=8,
    # out_channels=8, kernel_size=3, padding=1, spatial 16x16.
    N, C_x, C_skip, H, W = 2, 4, 4, 16, 16
    in_channels = C_x + C_skip
    out_channels = 8
    kernel_size, padding = 3, 1

    key = jax.random.PRNGKey(0)
    k_x, k_s, k_p = jax.random.split(key, 3)
    x = jax.random.normal(k_x, (N, C_x, H, W), jnp.float32)        # NCHW, like PyTorch
    skip = jax.random.normal(k_s, (N, C_skip, H, W), jnp.float32)  # NCHW, like PyTorch
    params = init_params(k_p, in_channels, out_channels, kernel_size)

    fwd = jax.jit(functools.partial(decoder_block_forward, padding=padding))
    out_x, out_up = fwd(params, x, skip)
    out_x, out_up = jax.block_until_ready(out_x), jax.block_until_ready(out_up)

    assert out_x.shape == (N, out_channels, H, W)
    assert out_up.shape == (N, out_channels // 2, 2 * H, 2 * W)

    ref_x, ref_up = reference_forward(params, x, skip, padding)
    assert jnp.allclose(out_x, ref_x, rtol=2e-4, atol=2e-4)
    assert jnp.allclose(out_up, ref_up, rtol=2e-4, atol=2e-4)

    print("KERNEL_OK")
</pallas_src>

<mosaic_0001>
module attributes {stable_mosaic.version = 11 : i64} {
  func.func @_decoder_block_kernel(%arg0: memref<2x16x128xf32, #tpu.memory_space<vmem>>, %arg1: memref<3x128x128xf32, #tpu.memory_space<vmem>>, %arg2: memref<1x128xf32, #tpu.memory_space<vmem>>, %arg3: memref<1x128xf32, #tpu.memory_space<vmem>>, %arg4: memref<3x128x128xf32, #tpu.memory_space<vmem>>, %arg5: memref<1x128xf32, #tpu.memory_space<vmem>>, %arg6: memref<1x128xf32, #tpu.memory_space<vmem>>, %arg7: memref<128x128xf32, #tpu.memory_space<vmem>>, %arg8: memref<128x128xf32, #tpu.memory_space<vmem>>, %arg9: memref<1x128xf32, #tpu.memory_space<vmem>>, %arg10: memref<32x128xf32, #tpu.memory_space<vmem>>, %arg11: memref<32x2x128xf32, #tpu.memory_space<vmem>>, %arg12: memref<2x18x128xf32, #tpu.memory_space<vmem>>, %arg13: memref<2x18x128xf32, #tpu.memory_space<vmem>>) attributes {dimension_semantics = [], scalar_prefetch = 0 : i64, scratch_operands = 2 : i64, tpu.core_type = #tpu.core_type<tc>} {
    %cst = arith.constant 0.000000e+00 : f32
    %0 = vector.broadcast %cst : f32 to vector<2x1x128xf32>
    %c0 = arith.constant 0 : index
    %c0_0 = arith.constant 0 : index
    %c0_1 = arith.constant 0 : index
    %1 = vector.load %arg12[%c0, %c0_0, %c0_1] : memref<2x18x128xf32, #tpu.memory_space<vmem>>, vector<2x1x128xf32>
    tpu.vector_store %arg12[%c0, %c0_0, %c0_1], %0 {strides = array<i32>} : memref<2x18x128xf32, #tpu.memory_space<vmem>>, vector<2x1x128xf32>,
    %cst_2 = arith.constant 0.000000e+00 : f32
    %2 = vector.broadcast %cst_2 : f32 to vector<2x1x128xf32>
    %c0_3 = arith.constant 0 : index
    %c17 = arith.constant 17 : index
    %c0_4 = arith.constant 0 : index
    %3 = vector.load %arg12[%c0_3, %c17, %c0_4] : memref<2x18x128xf32, #tpu.memory_space<vmem>>, vector<2x1x128xf32>
    tpu.vector_store %arg12[%c0_3, %c17, %c0_4], %2 {strides = array<i32>} : memref<2x18x128xf32, #tpu.memory_space<vmem>>, vector<2x1x128xf32>,
    %c0_5 = arith.constant 0 : index
    %c0_6 = arith.constant 0 : index
    %c0_7 = arith.constant 0 : index
    %4 = vector.load %arg0[%c0_5, %c0_6, %c0_7] : memref<2x16x128xf32, #tpu.memory_space<vmem>>, vector<2x16x128xf32>
    %c0_8 = arith.constant 0 : index
    %c1 = arith.constant 1 : index
    %c0_9 = arith.constant 0 : index
    %5 = vector.load %arg12[%c0_8, %c1, %c0_9] : memref<2x18x128xf32, #tpu.memory_space<vmem>>, vector<2x16x128xf32>
    tpu.vector_store %arg12[%c0_8, %c1, %c0_9], %4 {strides = array<i32>} : memref<2x18x128xf32, #tpu.memory_space<vmem>>, vector<2x16x128xf32>,
    %c0_10 = arith.constant 0 : index
    %c0_11 = arith.constant 0 : index
    %c0_12 = arith.constant 0 : index
    %6 = vector.load %arg12[%c0_10, %c0_11, %c0_12] : memref<2x18x128xf32, #tpu.memory_space<vmem>>, vector<2x16x128xf32>
    %7 = vector.shape_cast %6 : vector<2x16x128xf32> to vector<32x128xf32>
    %c0_13 = arith.constant 0 : index
    %c0_14 = arith.constant 0 : index
    %c0_15 = arith.constant 0 : index
    %8 = vector.load %arg1[%c0_13, %c0_14, %c0_15] : memref<3x128x128xf32, #tpu.memory_space<vmem>>, vector<1x128x128xf32>
    %9 = vector.shape_cast %8 : vector<1x128x128xf32> to vector<128x128xf32>
    %cst_16 = arith.constant dense<0.000000e+00> : vector<32x128xf32>
    %10 = tpu.matmul %7, %9, %cst_16 {dimension_numbers = #tpu.dot_dimension_numbers<[1], [0], [0], [1], [0, 0, 1, 1], [], []>} : vector<32x128xf32>, vector<128x128xf32>, vector<32x128xf32> -> vector<32x128xf32>
    %c0_17 = arith.constant 0 : index
    %c1_18 = arith.constant 1 : index
    %c0_19 = arith.constant 0 : index
    %11 = vector.load %arg12[%c0_17, %c1_18, %c0_19] : memref<2x18x128xf32, #tpu.memory_space<vmem>>, vector<2x16x128xf32>
    %12 = vector.shape_cast %11 : vector<2x16x128xf32> to vector<32x128xf32>
    %c1_20 = arith.constant 1 : index
    %c0_21 = arith.constant 0 : index
    %c0_22 = arith.constant 0 : index
    %13 = vector.load %arg1[%c1_20, %c0_21, %c0_22] : memref<3x128x128xf32, #tpu.memory_space<vmem>>, vector<1x128x128xf32>
    %14 = vector.shape_cast %13 : vector<1x128x128xf32> to vector<128x128xf32>
    %cst_23 = arith.constant dense<0.000000e+00> : vector<32x128xf32>
    %15 = tpu.matmul %12, %14, %cst_23 {dimension_numbers = #tpu.dot_dimension_numbers<[1], [0], [0], [1], [0, 0, 1, 1], [], []>} : vector<32x128xf32>, vector<128x128xf32>, vector<32x128xf32> -> vector<32x128xf32>
    %16 = arith.addf %10, %15 : vector<32x128xf32>
    %c0_24 = arith.constant 0 : index
    %c2 = arith.constant 2 : index
    %c0_25 = arith.constant 0 : index
    %17 = vector.load %arg12[%c0_24, %c2, %c0_25] : memref<2x18x128xf32, #tpu.memory_space<vmem>>, vector<2x16x128xf32>
    %18 = vector.shape_cast %17 : vector<2x16x128xf32> to vector<32x128xf32>
    %c2_26 = arith.constant 2 : index
    %c0_27 = arith.constant 0 : index
    %c0_28 = arith.constant 0 : index
    %19 = vector.load %arg1[%c2_26, %c0_27, %c0_28] : memref<3x128x128xf32, #tpu.memory_space<vmem>>, vector<1x128x128xf32>
    %20 = vector.shape_cast %19 : vector<1x128x128xf32> to vector<128x128xf32>
    %cst_29 = arith.constant dense<0.000000e+00> : vector<32x128xf32>
    %21 = tpu.matmul %18, %20, %cst_29 {dimension_numbers = #tpu.dot_dimension_numbers<[1], [0], [0], [1], [0, 0, 1, 1], [], []>} : vector<32x128xf32>, vector<128x128xf32>, vector<32x128xf32> -> vector<32x128xf32>
    %22 = arith.addf %16, %21 : vector<32x128xf32>
    %c0_30 = arith.constant 0 : index
    %c0_31 = arith.constant 0 : index
    %23 = vector.load %arg2[%c0_30, %c0_31] : memref<1x128xf32, #tpu.memory_space<vmem>>, vector<1x128xf32>
    %c0_32 = arith.constant 0 : index
    %c0_33 = arith.constant 0 : index
    %24 = vector.load %arg3[%c0_32, %c0_33] : memref<1x128xf32, #tpu.memory_space<vmem>>, vector<1x128xf32>
    %cst_34 = arith.constant dense<0.000000e+00> : vector<128xf32>
    %25 = vector.multi_reduction <add>, %22, %cst_34 [0] : vector<32x128xf32> to vector<128xf32>
    %26 = vector.shape_cast %25 : vector<128xf32> to vector<1x128xf32>
    %27 = arith.mulf %22, %22 : vector<32x128xf32>
    %cst_35 = arith.constant dense<0.000000e+00> : vector<128xf32>
    %28 = vector.multi_reduction <add>, %27, %cst_35 [0] : vector<32x128xf32> to vector<128xf32>
    %29 = vector.shape_cast %28 : vector<128xf32> to vector<1x128xf32>
    %c0_36 = arith.constant 0 : index
    %c0_37 = arith.constant 0 : index
    %30 = vector.load %arg7[%c0_36, %c0_37] : memref<128x128xf32, #tpu.memory_space<vmem>>, vector<128x128xf32>
    %cst_38 = arith.constant dense<0.000000e+00> : vector<1x128xf32>
    %31 = tpu.matmul %26, %30, %cst_38 {dimension_numbers = #tpu.dot_dimension_numbers<[1], [0], [0], [1], [0, 0, 1, 1], [], []>} : vector<1x128xf32>, vector<128x128xf32>, vector<1x128xf32> -> vector<1x128xf32>
    %c0_39 = arith.constant 0 : index
    %c0_40 = arith.constant 0 : index
    %32 = vector.load %arg7[%c0_39, %c0_40] : memref<128x128xf32, #tpu.memory_space<vmem>>, vector<128x128xf32>
    %cst_41 = arith.constant dense<0.000000e+00> : vector<1x128xf32>
    %33 = tpu.matmul %29, %32, %cst_41 {dimension_numbers = #tpu.dot_dimension_numbers<[1], [0], [0], [1], [0, 0, 1, 1], [], []>} : vector<1x128xf32>, vector<128x128xf32>, vector<1x128xf32> -> vector<1x128xf32>
    %34 = arith.mulf %31, %31 : vector<1x128xf32>
    %35 = arith.subf %33, %34 : vector<1x128xf32>
    %cst_42 = arith.constant 9.99999974E-6 : f32
    %36 = vector.broadcast %cst_42 : f32 to vector<1x128xf32>
    %37 = arith.addf %35, %36 : vector<1x128xf32>
    %38 = math.rsqrt %37 : vector<1x128xf32>
    %39 = arith.mulf %23, %38 : vector<1x128xf32>
    %40 = arith.mulf %31, %39 : vector<1x128xf32>
    %41 = arith.subf %24, %40 : vector<1x128xf32>
    %42 = vector.broadcast %39 : vector<1x128xf32> to vector<32x128xf32>
    %43 = arith.mulf %22, %42 : vector<32x128xf32>
    %44 = vector.broadcast %41 : vector<1x128xf32> to vector<32x128xf32>
    %45 = arith.addf %43, %44 : vector<32x128xf32>
    %cst_43 = arith.constant 0.000000e+00 : f32
    %46 = vector.broadcast %cst_43 : f32 to vector<32x128xf32>
    %47 = arith.maximumf %45, %46 : vector<32x128xf32>
    %cst_44 = arith.constant 0.000000e+00 : f32
    %48 = vector.broadcast %cst_44 : f32 to vector<2x1x128xf32>
    %c0_45 = arith.constant 0 : index
    %c0_46 = arith.constant 0 : index
    %c0_47 = arith.constant 0 : index
    %49 = vector.load %arg13[%c0_45, %c0_46, %c0_47] : memref<2x18x128xf32, #tpu.memory_space<vmem>>, vector<2x1x128xf32>
    tpu.vector_store %arg13[%c0_45, %c0_46, %c0_47], %48 {strides = array<i32>} : memref<2x18x128xf32, #tpu.memory_space<vmem>>, vector<2x1x128xf32>,
    %cst_48 = arith.constant 0.000000e+00 : f32
    %50 = vector.broadcast %cst_48 : f32 to vector<2x1x128xf32>
    %c0_49 = arith.constant 0 : index
    %c17_50 = arith.constant 17 : index
    %c0_51 = arith.constant 0 : index
    %51 = vector.load %arg13[%c0_49, %c17_50, %c0_51] : memref<2x18x128xf32, #tpu.memory_space<vmem>>, vector<2x1x128xf32>
    tpu.vector_store %arg13[%c0_49, %c17_50, %c0_51], %50 {strides = array<i32>} : memref<2x18x128xf32, #tpu.memory_space<vmem>>, vector<2x1x128xf32>,
    %52 = vector.shape_cast %47 : vector<32x128xf32> to vector<2x16x128xf32>
    %c0_52 = arith.constant 0 : index
    %c1_53 = arith.constant 1 : index
    %c0_54 = arith.constant 0 : index
    %53 = vector.load %arg13[%c0_52, %c1_53, %c0_54] : memref<2x18x128xf32, #tpu.memory_space<vmem>>, vector<2x16x128xf32>
    tpu.vector_store %arg13[%c0_52, %c1_53, %c0_54], %52 {strides = array<i32>} : memref<2x18x128xf32, #tpu.memory_space<vmem>>, vector<2x16x128xf32>,
    %c0_55 = arith.constant 0 : index
    %c0_56 = arith.constant 0 : index
    %c0_57 = arith.constant 0 : index
    %54 = vector.load %arg13[%c0_55, %c0_56, %c0_57] : memref<2x18x128xf32, #tpu.memory_space<vmem>>, vector<2x16x128xf32>
    %55 = vector.shape_cast %54 : vector<2x16x128xf32> to vector<32x128xf32>
    %c0_58 = arith.constant 0 : index
    %c0_59 = arith.constant 0 : index
    %c0_60 = arith.constant 0 : index
    %56 = vector.load %arg4[%c0_58, %c0_59, %c0_60] : memref<3x128x128xf32, #tpu.memory_space<vmem>>, vector<1x128x128xf32>
    %57 = vector.shape_cast %56 : vector<1x128x128xf32> to vector<128x128xf32>
    %cst_61 = arith.constant dense<0.000000e+00> : vector<32x128xf32>
    %58 = tpu.matmul %55, %57, %cst_61 {dimension_numbers = #tpu.dot_dimension_numbers<[1], [0], [0], [1], [0, 0, 1, 1], [], []>} : vector<32x128xf32>, vector<128x128xf32>, vector<32x128xf32> -> vector<32x128xf32>
    %c0_62 = arith.constant 0 : index
    %c1_63 = arith.constant 1 : index
    %c0_64 = arith.constant 0 : index
    %59 = vector.load %arg13[%c0_62, %c1_63, %c0_64] : memref<2x18x128xf32, #tpu.memory_space<vmem>>, vector<2x16x128xf32>
    %60 = vector.shape_cast %59 : vector<2x16x128xf32> to vector<32x128xf32>
    %c1_65 = arith.constant 1 : index
    %c0_66 = arith.constant 0 : index
    %c0_67 = arith.constant 0 : index
    %61 = vector.load %arg4[%c1_65, %c0_66, %c0_67] : memref<3x128x128xf32, #tpu.memory_space<vmem>>, vector<1x128x128xf32>
    %62 = vector.shape_cast %61 : vector<1x128x128xf32> to vector<128x128xf32>
    %cst_68 = arith.constant dense<0.000000e+00> : vector<32x128xf32>
    %63 = tpu.matmul %60, %62, %cst_68 {dimension_numbers = #tpu.dot_dimension_numbers<[1], [0], [0], [1], [0, 0, 1, 1], [], []>} : vector<32x128xf32>, vector<128x128xf32>, vector<32x128xf32> -> vector<32x128xf32>
    %64 = arith.addf %58, %63 : vector<32x128xf32>
    %c0_69 = arith.constant 0 : index
    %c2_70 = arith.constant 2 : index
    %c0_71 = arith.constant 0 : index
    %65 = vector.load %arg13[%c0_69, %c2_70, %c0_71] : memref<2x18x128xf32, #tpu.memory_space<vmem>>, vector<2x16x128xf32>
    %66 = vector.shape_cast %65 : vector<2x16x128xf32> to vector<32x128xf32>
    %c2_72 = arith.constant 2 : index
    %c0_73 = arith.constant 0 : index
    %c0_74 = arith.constant 0 : index
    %67 = vector.load %arg4[%c2_72, %c0_73, %c0_74] : memref<3x128x128xf32, #tpu.memory_space<vmem>>, vector<1x128x128xf32>
    %68 = vector.shape_cast %67 : vector<1x128x128xf32> to vector<128x128xf32>
    %cst_75 = arith.constant dense<0.000000e+00> : vector<32x128xf32>
    %69 = tpu.matmul %66, %68, %cst_75 {dimension_numbers = #tpu.dot_dimension_numbers<[1], [0], [0], [1], [0, 0, 1, 1], [], []>} : vector<32x128xf32>, vector<128x128xf32>, vector<32x128xf32> -> vector<32x128xf32>
    %70 = arith.addf %64, %69 : vector<32x128xf32>
    %c0_76 = arith.constant 0 : index
    %c0_77 = arith.constant 0 : index
    %71 = vector.load %arg5[%c0_76, %c0_77] : memref<1x128xf32, #tpu.memory_space<vmem>>, vector<1x128xf32>
    %c0_78 = arith.constant 0 : index
    %c0_79 = arith.constant 0 : index
    %72 = vector.load %arg6[%c0_78, %c0_79] : memref<1x128xf32, #tpu.memory_space<vmem>>, vector<1x128xf32>
    %cst_80 = arith.constant dense<0.000000e+00> : vector<128xf32>
    %73 = vector.multi_reduction <add>, %70, %cst_80 [0] : vector<32x128xf32> to vector<128xf32>
    %74 = vector.shape_cast %73 : vector<128xf32> to vector<1x128xf32>
    %75 = arith.mulf %70, %70 : vector<32x128xf32>
    %cst_81 = arith.constant dense<0.000000e+00> : vector<128xf32>
    %76 = vector.multi_reduction <add>, %75, %cst_81 [0] : vector<32x128xf32> to vector<128xf32>
    %77 = vector.shape_cast %76 : vector<128xf32> to vector<1x128xf32>
    %c0_82 = arith.constant 0 : index
    %c0_83 = arith.constant 0 : index
    %78 = vector.load %arg7[%c0_82, %c0_83] : memref<128x128xf32, #tpu.memory_space<vmem>>, vector<128x128xf32>
    %cst_84 = arith.constant dense<0.000000e+00> : vector<1x128xf32>
    %79 = tpu.matmul %74, %78, %cst_84 {dimension_numbers = #tpu.dot_dimension_numbers<[1], [0], [0], [1], [0, 0, 1, 1], [], []>} : vector<1x128xf32>, vector<128x128xf32>, vector<1x128xf32> -> vector<1x128xf32>
    %c0_85 = arith.constant 0 : index
    %c0_86 = arith.constant 0 : index
    %80 = vector.load %arg7[%c0_85, %c0_86] : memref<128x128xf32, #tpu.memory_space<vmem>>, vector<128x128xf32>
    %cst_87 = arith.constant dense<0.000000e+00> : vector<1x128xf32>
    %81 = tpu.matmul %77, %80, %cst_87 {dimension_numbers = #tpu.dot_dimension_numbers<[1], [0], [0], [1], [0, 0, 1, 1], [], []>} : vector<1x128xf32>, vector<128x128xf32>, vector<1x128xf32> -> vector<1x128xf32>
    %82 = arith.mulf %79, %79 : vector<1x128xf32>
    %83 = arith.subf %81, %82 : vector<1x128xf32>
    %cst_88 = arith.constant 9.99999974E-6 : f32
    %84 = vector.broadcast %cst_88 : f32 to vector<1x128xf32>
    %85 = arith.addf %83, %84 : vector<1x128xf32>
    %86 = math.rsqrt %85 : vector<1x128xf32>
    %87 = arith.mulf %71, %86 : vector<1x128xf32>
    %88 = arith.mulf %79, %87 : vector<1x128xf32>
    %89 = arith.subf %72, %88 : vector<1x128xf32>
    %90 = vector.broadcast %87 : vector<1x128xf32> to vector<32x128xf32>
    %91 = arith.mulf %70, %90 : vector<32x128xf32>
    %92 = vector.broadcast %89 : vector<1x128xf32> to vector<32x128xf32>
    %93 = arith.addf %91, %92 : vector<32x128xf32>
    %cst_89 = arith.constant 0.000000e+00 : f32
    %94 = vector.broadcast %cst_89 : f32 to vector<32x128xf32>
    %95 = arith.maximumf %93, %94 : vector<32x128xf32>
    %c0_90 = arith.constant 0 : index
    %c0_91 = arith.constant 0 : index
    %96 = vector.load %arg10[%c0_90, %c0_91] : memref<32x128xf32, #tpu.memory_space<vmem>>, vector<32x128xf32>
    tpu.vector_store %arg10[%c0_90, %c0_91], %95 {strides = array<i32>} : memref<32x128xf32, #tpu.memory_space<vmem>>, vector<32x128xf32>,
    %c0_92 = arith.constant 0 : index
    %c0_93 = arith.constant 0 : index
    %97 = vector.load %arg8[%c0_92, %c0_93] : memref<128x128xf32, #tpu.memory_space<vmem>>, vector<128x128xf32>
    %cst_94 = arith.constant dense<0.000000e+00> : vector<32x128xf32>
    %98 = tpu.matmul %95, %97, %cst_94 {dimension_numbers = #tpu.dot_dimension_numbers<[1], [0], [0], [1], [0, 0, 1, 1], [], []>} : vector<32x128xf32>, vector<128x128xf32>, vector<32x128xf32> -> vector<32x128xf32>
    %c0_95 = arith.constant 0 : index
    %c0_96 = arith.constant 0 : index
    %99 = vector.load %arg9[%c0_95, %c0_96] : memref<1x128xf32, #tpu.memory_space<vmem>>, vector<1x128xf32>
    %100 = vector.broadcast %99 : vector<1x128xf32> to vector<32x128xf32>
    %101 = arith.addf %98, %100 : vector<32x128xf32>
    %102 = vector.shape_cast %101 : vector<32x128xf32> to vector<32x1x128xf32>
    %c0_97 = arith.constant 0 : index
    %c0_98 = arith.constant 0 : index
    %c0_99 = arith.constant 0 : index
    %103 = vector.load %arg11[%c0_97, %c0_98, %c0_99] : memref<32x2x128xf32, #tpu.memory_space<vmem>>, vector<32x1x128xf32>
    tpu.vector_store %arg11[%c0_97, %c0_98, %c0_99], %102 {strides = array<i32>} : memref<32x2x128xf32, #tpu.memory_space<vmem>>, vector<32x1x128xf32>,
    %c0_100 = arith.constant 0 : index
    %c1_101 = arith.constant 1 : index
    %c0_102 = arith.constant 0 : index
    %104 = vector.load %arg11[%c0_100, %c1_101, %c0_102] : memref<32x2x128xf32, #tpu.memory_space<vmem>>, vector<32x1x128xf32>
    tpu.vector_store %arg11[%c0_100, %c1_101, %c0_102], %102 {strides = array<i32>} : memref<32x2x128xf32, #tpu.memory_space<vmem>>, vector<32x1x128xf32>,
    return
  }
}

</mosaic_0001>

<llo_original>
// kernel: decoder_block_forward.1
$region0: #{decoder_block_forward.1}
  #allocation0 [shape = 'u32[]', space=smem, size = 0x4, offset = 0x4, fixed_abs, tag = 'smem constant byte address 0x4 - core index']
  #allocation1 [shape = 'u32[144,128]{1,0:T(1,128)}', space=vmem, size = 0x12000, scoped, tag = 'internal scratch']
  #allocation2 [shape = 'f32[2,18,128]{2,1,0:T(8,128)}', space=vmem, size = 0x6000, scoped, tag = 'scratch operand']
  #allocation3 [shape = 'f32[2,18,128]{2,1,0:T(8,128)}', space=vmem, size = 0x6000, scoped, tag = 'scratch operand']
  %s0 = inlined_call_operand.vmem [shape: f32[2,16,128], index: 0, kind: input, shape index: {}]
  %s1 = inlined_call_operand.vmem [shape: f32[3,128,128], index: 1, kind: input, shape index: {}]
  %s2 = inlined_call_operand.vmem [shape: f32[1,128], index: 2, kind: input, shape index: {}]
  %s3 = inlined_call_operand.vmem [shape: f32[1,128], index: 3, kind: input, shape index: {}]
  %s4 = inlined_call_operand.vmem [shape: f32[3,128,128], index: 4, kind: input, shape index: {}]
  %s5 = inlined_call_operand.vmem [shape: f32[1,128], index: 5, kind: input, shape index: {}]
  %s6 = inlined_call_operand.vmem [shape: f32[1,128], index: 6, kind: input, shape index: {}]
  %s7 = inlined_call_operand.vmem [shape: f32[128,128], index: 7, kind: input, shape index: {}]
  %s8 = inlined_call_operand.vmem [shape: f32[128,128], index: 8, kind: input, shape index: {}]
  %s9 = inlined_call_operand.vmem [shape: f32[1,128], index: 9, kind: input, shape index: {}]
  %s10 = inlined_call_operand.vmem [shape: f32[32,128], index: 10, kind: output, shape index: {0}]
  %s11 = inlined_call_operand.vmem [shape: f32[32,2,128], index: 11, kind: output, shape index: {1}]
  %12 = xla_tuple %s10, %s11
  %s13 = sld [smem:[#allocation0]]
  $region58: #{decoder_block_forward.1} parent=0
    _
  %s15 = ssub.s32 1, %s13
  %s16 = scalar_select 0, %s15, %s13
  // Predicated region
  $region2: #{decoder_block_forward.1} parent=0 // pred_check
    _
  $region3: #{decoder_block_forward.1} parent=0 // pred_check_branch
    %18 = sbr.rel (0) target = $region5
  $region4: #{decoder_block_forward.1} parent=0 // pred_region
    _
  $region5: #{decoder_block_forward.1} parent=0 // pred_fallthru
    _
  // Predicated region
  $region6: #{decoder_block_forward.1} parent=0 // pred_check
    _
  $region7: #{decoder_block_forward.1} parent=0 // pred_check_branch
    %20 = sbr.rel (0) target = $region9
  $region8: #{decoder_block_forward.1} parent=0 // pred_region
    _
  $region9: #{decoder_block_forward.1} parent=0 // pred_fallthru
    _
  // Predicated region
  $region10: #{decoder_block_forward.1} parent=0 // pred_check
    _
  $region11: #{decoder_block_forward.1} parent=0 // pred_check_branch
    %22 = sbr.rel (0) target = $region13
  $region12: #{decoder_block_forward.1} parent=0 // pred_region
    _
  $region13: #{decoder_block_forward.1} parent=0 // pred_fallthru
    _
  // Predicated region
  $region14: #{decoder_block_forward.1} parent=0 // pred_check
    _
  $region15: #{decoder_block_forward.1} parent=0 // pred_check_branch
    %24 = sbr.rel (0) target = $region17
  $region16: #{decoder_block_forward.1} parent=0 // pred_region
    _
  $region17: #{decoder_block_forward.1} parent=0 // pred_fallthru
    _
  // Predicated region
  $region18: #{decoder_block_forward.1} parent=0 // pred_check
    _
  $region19: #{decoder_block_forward.1} parent=0 // pred_check_branch
    %26 = sbr.rel (0) target = $region21
  $region20: #{decoder_block_forward.1} parent=0 // pred_region
    _
  $region21: #{decoder_block_forward.1} parent=0 // pred_fallthru
    _
  // Predicated region
  $region22: #{decoder_block_forward.1} parent=0 // pred_check
    _
  $region23: #{decoder_block_forward.1} parent=0 // pred_check_branch
    %28 = sbr.rel (0) target = $region25
  $region24: #{decoder_block_forward.1} parent=0 // pred_region
    _
  $region25: #{decoder_block_forward.1} parent=0 // pred_fallthru
    _
  // Predicated region
  $region26: #{decoder_block_forward.1} parent=0 // pred_check
    _
  $region27: #{decoder_block_forward.1} parent=0 // pred_check_branch
    %30 = sbr.rel (0) target = $region29
  $region28: #{decoder_block_forward.1} parent=0 // pred_region
    _
  $region29: #{decoder_block_forward.1} parent=0 // pred_fallthru
    _
  // Predicated region
  $region30: #{decoder_block_forward.1} parent=0 // pred_check
    _
  $region31: #{decoder_block_forward.1} parent=0 // pred_check_branch
    %32 = sbr.rel (0) target = $region33
  $region32: #{decoder_block_forward.1} parent=0 // pred_region
    _
  $region33: #{decoder_block_forward.1} parent=0 // pred_fallthru
    _
  // Predicated region
  $region34: #{decoder_block_forward.1} parent=0 // pred_check
    _
  $region35: #{decoder_block_forward.1} parent=0 // pred_check_branch
    %34 = sbr.rel (0) target = $region37
  $region36: #{decoder_block_forward.1} parent=0 // pred_region
    _
  $region37: #{decoder_block_forward.1} parent=0 // pred_fallthru
    _
  // Predicated region
  $region38: #{decoder_block_forward.1} parent=0 // pred_check
    _
  $region39: #{decoder_block_forward.1} parent=0 // pred_check_branch
    %36 = sbr.rel (0) target = $region41
  $region40: #{decoder_block_forward.1} parent=0 // pred_region
    _
  $region41: #{decoder_block_forward.1} parent=0 // pred_fallthru
    _
  %37 = vst [vmem:[#allocation2] sm:$0x1] 0.0
  %38 = vst [vmem:[#allocation2 + $0x18] sm:$0x1] 0.0
  %39 = vst [vmem:[#allocation2 + $0x11] sm:$0x1] 0.0
  %40 = vst [vmem:[#allocation2 + $0x29] sm:$0x1] 0.0
  %v41 = vld [vmem:[%s0] sm:$0xff]
  %v42 = vld [vmem:[%s0 + $0x8] sm:$0xff]
  %v43 = vld [vmem:[%s0 + $0x10] sm:$0xff]
  %v44 = vld [vmem:[%s0 + $0x18] sm:$0xff]
  %45 = vst [vmem:[#allocation2 + $0x1] sm:$0xff] %v41
  %46 = vst [vmem:[#allocation2 + $0x9] sm:$0xff] %v42
  %47 = vst [vmem:[#allocation2 + $0x19] sm:$0xff] %v43
  %48 = vst [vmem:[#allocation2 + $0x21] sm:$0xff] %v44
  %v49 = vld [vmem:[#allocation2] sm:$0xff]
  %v50 = vld [vmem:[#allocation2 + $0x8] sm:$0xff]
  %v51 = vld [vmem:[#allocation2 + $0x18] sm:$0xff]
  %v52 = vld [vmem:[#allocation2 + $0x20] sm:$0xff]
  %v53 = vld [vmem:[%s1] sm:$0xff]
  %v54 = vld [vmem:[%s1 + $0x8] sm:$0xff]
  %v55 = vld [vmem:[%s1 + $0x10] sm:$0xff]
  %v56 = vld [vmem:[%s1 + $0x18] sm:$0xff]
  %v57 = vld [vmem:[%s1 + $0x20] sm:$0xff]
  %v58 = vld [vmem:[%s1 + $0x28] sm:$0xff]
  %v59 = vld [vmem:[%s1 + $0x30] sm:$0xff]
  %v60 = vld [vmem:[%s1 + $0x38] sm:$0xff]
  %v61 = vld [vmem:[%s1 + $0x40] sm:$0xff]
  %v62 = vld [vmem:[%s1 + $0x48] sm:$0xff]
  %v63 = vld [vmem:[%s1 + $0x50] sm:$0xff]
  %v64 = vld [vmem:[%s1 + $0x58] sm:$0xff]
  %v65 = vld [vmem:[%s1 + $0x60] sm:$0xff]
  %v66 = vld [vmem:[%s1 + $0x68] sm:$0xff]
  %v67 = vld [vmem:[%s1 + $0x70] sm:$0xff]
  %v68 = vld [vmem:[%s1 + $0x78] sm:$0xff]
  %v69 = vld [vmem:[#allocation2 + $0x1] sm:$0xff]
  %v70 = vld [vmem:[#allocation2 + $0x9] sm:$0xff]
  %v71 = vld [vmem:[#allocation2 + $0x19] sm:$0xff]
  %v72 = vld [vmem:[#allocation2 + $0x21] sm:$0xff]
  %s73 = scalar_lea.vmem %s1, 128
  %v74 = vld [vmem:[%s73] sm:$0xff]
  %v75 = vld [vmem:[%s73 + $0x8] sm:$0xff]
  %v76 = vld [vmem:[%s73 + $0x10] sm:$0xff]
  %v77 = vld [vmem:[%s73 + $0x18] sm:$0xff]
  %v78 = vld [vmem:[%s73 + $0x20] sm:$0xff]
  %v79 = vld [vmem:[%s73 + $0x28] sm:$0xff]
  %v80 = vld [vmem:[%s73 + $0x30] sm:$0xff]
  %v81 = vld [vmem:[%s73 + $0x38] sm:$0xff]
  %v82 = vld [vmem:[%s73 + $0x40] sm:$0xff]
  %v83 = vld [vmem:[%s73 + $0x48] sm:$0xff]
  %v84 = vld [vmem:[%s73 + $0x50] sm:$0xff]
  %v85 = vld [vmem:[%s73 + $0x58] sm:$0xff]
  %v86 = vld [vmem:[%s73 + $0x60] sm:$0xff]
  %v87 = vld [vmem:[%s73 + $0x68] sm:$0xff]
  %v88 = vld [vmem:[%s73 + $0x70] sm:$0xff]
  %v89 = vld [vmem:[%s73 + $0x78] sm:$0xff]
  %90 = vmatprep.subr.mxu0 0.0
  %91 = vmatpush1.msra.mxu0 %v89
  %92 = vmatprep.subr.mxu0 0.0
  %93 = vmatpush1.msra.mxu0 %v88
  %94 = vmatprep.subr.mxu0 0.0
  %95 = vmatpush1.msra.mxu0 %v87
  %96 = vmatprep.subr.mxu0 0.0
  %97 = vmatpush1.msra.mxu0 %v86
  %98 = vmatprep.subr.mxu0 0.0
  %99 = vmatpush1.msra.mxu0 %v85
  %100 = vmatprep.subr.mxu0 0.0
  %101 = vmatpush1.msra.mxu0 %v84
  %102 = vmatprep.subr.mxu0 0.0
  %103 = vmatpush1.msra.mxu0 %v83
  %104 = vmatprep.subr.mxu0 0.0
  %105 = vmatpush1.msra.mxu0 %v82
  %106 = vmatprep.subr.mxu0 0.0
  %107 = vmatpush1.msra.mxu0 %v81
  %108 = vmatprep.subr.mxu0 0.0
  %109 = vmatpush1.msra.mxu0 %v80
  %110 = vmatprep.subr.mxu0 0.0
  %111 = vmatpush1.msra.mxu0 %v79
  %112 = vmatprep.subr.mxu0 0.0
  %113 = vmatpush1.msra.mxu0 %v78
  %114 = vmatprep.subr.mxu0 0.0
  %115 = vmatpush1.msra.mxu0 %v77
  %116 = vmatprep.subr.mxu0 0.0
  %117 = vmatpush1.msra.mxu0 %v76
  %118 = vmatprep.subr.mxu0 0.0
  %119 = vmatpush1.msra.mxu0 %v75
  %120 = vmatprep.subr.mxu0 0.0
  %121 = vmatpush1.msra.mxu0 %v74
  %122 = vmatprep.subr.mxu0 0.0
  %123 = vmatpush2.msra.mxu0 0.0
  %124 = vmatprep.subr.mxu0 0.0
  %125 = vmatpush2.msra.mxu0 0.0
  %126 = vmatprep.subr.mxu0 0.0
  %127 = vmatpush2.msra.mxu0 0.0
  %128 = vmatprep.subr.mxu0 0.0
  %129 = vmatpush2.msra.mxu0 0.0
  %130 = vmatprep.subr.mxu0 0.0
  %131 = vmatpush2.msra.mxu0 0.0
  %132 = vmatprep.subr.mxu0 0.0
  %133 = vmatpush2.msra.mxu0 0.0
  %134 = vmatprep.subr.mxu0 0.0
  %135 = vmatpush2.msra.mxu0 0.0
  %136 = vmatprep.subr.mxu0 0.0
  %137 = vmatpush2.msra.mxu0 0.0
  %138 = vmatprep.subr.mxu0 0.0
  %139 = vmatpush2.msra.mxu0 0.0
  %140 = vmatprep.subr.mxu0 0.0
  %141 = vmatpush2.msra.mxu0 0.0
  %142 = vmatprep.subr.mxu0 0.0
  %143 = vmatpush2.msra.mxu0 0.0
  %144 = vmatprep.subr.mxu0 0.0
  %145 = vmatpush2.msra.mxu0 0.0
  %146 = vmatprep.subr.mxu0 0.0
  %147 = vmatpush2.msra.mxu0 0.0
  %148 = vmatprep.subr.mxu0 0.0
  %149 = vmatpush2.msra.mxu0 0.0
  %150 = vmatprep.subr.mxu0 0.0
  %151 = vmatpush2.msra.mxu0 0.0
  %152 = vmatprep.subr.mxu0 0.0
  %153 = vmatpush2.msra.mxu0 0.0
  %154 = vmatprep.mubr.f32.mxu0 0.0
  %155 = vmatmul.mubr.f32.gmra.mxu0 %v69
  %v156 = vpop.f32.mrf.mxu0
  %v157 = vadd.f32 0.0, %v156
  %v158 = vpop.f32.mrf.mxu0
  %159 = vmatprep.mubr.f32.mxu0 0.0
  %160 = vmatmul.mubr.f32.gmra.mxu0 %v70
  %v161 = vpop.f32.mrf.mxu0
  %v162 = vadd.f32 0.0, %v161
  %v163 = vpop.f32.mrf.mxu0
  %164 = vmatprep.mubr.f32.mxu0 0.0
  %165 = vmatmul.mubr.f32.gmra.mxu0 %v71
  %v166 = vpop.f32.mrf.mxu0
  %v167 = vadd.f32 0.0, %v166
  %v168 = vpop.f32.mrf.mxu0
  %169 = vmatprep.mubr.f32.mxu0 0.0
  %170 = vmatmul.mubr.f32.gmra.mxu0 %v72
  %v171 = vpop.f32.mrf.mxu0
  %v172 = vadd.f32 0.0, %v171
  %v173 = vpop.f32.mrf.mxu0
  %174 = vdwg.mxu0
  %175 = vmatprep.subr.mxu0 0.0
  %176 = vmatpush1.msra.mxu0 %v68
  %177 = vmatprep.subr.mxu0 0.0
  %178 = vmatpush1.msra.mxu0 %v67
  %179 = vmatprep.subr.mxu0 0.0
  %180 = vmatpush1.msra.mxu0 %v66
  %181 = vmatprep.subr.mxu0 0.0
  %182 = vmatpush1.msra.mxu0 %v65
  %183 = vmatprep.subr.mxu0 0.0
  %184 = vmatpush1.msra.mxu0 %v64
  %185 = vmatprep.subr.mxu0 0.0
  %186 = vmatpush1.msra.mxu0 %v63
  %187 = vmatprep.subr.mxu0 0.0
  %188 = vmatpush1.msra.mxu0 %v62
  %189 = vmatprep.subr.mxu0 0.0
  %190 = vmatpush1.msra.mxu0 %v61
  %191 = vmatprep.subr.mxu0 0.0
  %192 = vmatpush1.msra.mxu0 %v60
  %193 = vmatprep.subr.mxu0 0.0
  %194 = vmatpush1.msra.mxu0 %v59
  %195 = vmatprep.subr.mxu0 0.0
  %196 = vmatpush1.msra.mxu0 %v58
  %197 = vmatprep.subr.mxu0 0.0
  %198 = vmatpush1.msra.mxu0 %v57
  %199 = vmatprep.subr.mxu0 0.0
  %200 = vmatpush1.msra.mxu0 %v56
  %201 = vmatprep.subr.mxu0 0.0
  %202 = vmatpush1.msra.mxu0 %v55
  %203 = vmatprep.subr.mxu0 0.0
  %204 = vmatpush1.msra.mxu0 %v54
  %205 = vmatprep.subr.mxu0 0.0
  %206 = vmatpush1.msra.mxu0 %v53
  %207 = vmatprep.subr.mxu0 0.0
  %208 = vmatpush2.msra.mxu0 0.0
  %209 = vmatprep.subr.mxu0 0.0
  %210 = vmatpush2.msra.mxu0 0.0
  %211 = vmatprep.subr.mxu0 0.0
  %212 = vmatpush2.msra.mxu0 0.0
  %213 = vmatprep.subr.mxu0 0.0
  %214 = vmatpush2.msra.mxu0 0.0
  %215 = vmatprep.subr.mxu0 0.0
  %216 = vmatpush2.msra.mxu0 0.0
  %217 = vmatprep.subr.mxu0 0.0
  %218 = vmatpush2.msra.mxu0 0.0
  %219 = vmatprep.subr.mxu0 0.0
  %220 = vmatpush2.msra.mxu0 0.0
  %221 = vmatprep.subr.mxu0 0.0
  %222 = vmatpush2.msra.mxu0 0.0
  %223 = vmatprep.subr.mxu0 0.0
  %224 = vmatpush2.msra.mxu0 0.0
  %225 = vmatprep.subr.mxu0 0.0
  %226 = vmatpush2.msra.mxu0 0.0
  %227 = vmatprep.subr.mxu0 0.0
  %228 = vmatpush2.msra.mxu0 0.0
  %229 = vmatprep.subr.mxu0 0.0
  %230 = vmatpush2.msra.mxu0 0.0
  %231 = vmatprep.subr.mxu0 0.0
  %232 = vmatpush2.msra.mxu0 0.0
  %233 = vmatprep.subr.mxu0 0.0
  %234 = vmatpush2.msra.mxu0 0.0
  %235 = vmatprep.subr.mxu0 0.0
  %236 = vmatpush2.msra.mxu0 0.0
  %237 = vmatprep.subr.mxu0 0.0
  %238 = vmatpush2.msra.mxu0 0.0
  %239 = vmatprep.mubr.f32.mxu0 0.0
  %240 = vmatmul.mubr.f32.gmra.mxu0 %v49
  %v241 = vpop.f32.mrf.mxu0
  %v242 = vadd.f32 %v157, %v241
  %v243 = vpop.f32.mrf.mxu0
  %244 = vmatprep.mubr.f32.mxu0 0.0
  %245 = vmatmul.mubr.f32.gmra.mxu0 %v50
  %v246 = vpop.f32.mrf.mxu0
  %v247 = vadd.f32 %v162, %v246
  %v248 = vpop.f32.mrf.mxu0
  %249 = vmatprep.mubr.f32.mxu0 0.0
  %250 = vmatmul.mubr.f32.gmra.mxu0 %v51
  %v251 = vpop.f32.mrf.mxu0
  %v252 = vadd.f32 %v167, %v251
  %v253 = vpop.f32.mrf.mxu0
  %254 = vmatprep.mubr.f32.mxu0 0.0
  %255 = vmatmul.mubr.f32.gmra.mxu0 %v52
  %v256 = vpop.f32.mrf.mxu0
  %v257 = vadd.f32 %v172, %v256
  %v258 = vpop.f32.mrf.mxu0
  %259 = vdwg.mxu0
  %v260 = vld [vmem:[#allocation2 + $0x2] sm:$0xff]
  %v261 = vld [vmem:[#allocation2 + $0xa] sm:$0xff]
  %v262 = vld [vmem:[#allocation2 + $0x1a] sm:$0xff]
  %v263 = vld [vmem:[#allocation2 + $0x22] sm:$0xff]
  %s264 = scalar_lea.vmem %s1, 256
  %v265 = vld [vmem:[%s264] sm:$0xff]
  %v266 = vld [vmem:[%s264 + $0x8] sm:$0xff]
  %v267 = vld [vmem:[%s264 + $0x10] sm:$0xff]
  %v268 = vld [vmem:[%s264 + $0x18] sm:$0xff]
  %v269 = vld [vmem:[%s264 + $0x20] sm:$0xff]
  %v270 = vld [vmem:[%s264 + $0x28] sm:$0xff]
  %v271 = vld [vmem:[%s264 + $0x30] sm:$0xff]
  %v272 = vld [vmem:[%s264 + $0x38] sm:$0xff]
  %v273 = vld [vmem:[%s264 + $0x40] sm:$0xff]
  %v274 = vld [vmem:[%s264 + $0x48] sm:$0xff]
  %v275 = vld [vmem:[%s264 + $0x50] sm:$0xff]
  %v276 = vld [vmem:[%s264 + $0x58] sm:$0xff]
  %v277 = vld [vmem:[%s264 + $0x60] sm:$0xff]
  %v278 = vld [vmem:[%s264 + $0x68] sm:$0xff]
  %v279 = vld [vmem:[%s264 + $0x70] sm:$0xff]
  %v280 = vld [vmem:[%s264 + $0x78] sm:$0xff]
  %281 = vmatprep.subr.mxu0 0.0
  %282 = vmatpush1.msra.mxu0 %v280
  %283 = vmatprep.subr.mxu0 0.0
  %284 = vmatpush1.msra.mxu0 %v279
  %285 = vmatprep.subr.mxu0 0.0
  %286 = vmatpush1.msra.mxu0 %v278
  %287 = vmatprep.subr.mxu0 0.0
  %288 = vmatpush1.msra.mxu0 %v277
  %289 = vmatprep.subr.mxu0 0.0
  %290 = vmatpush1.msra.mxu0 %v276
  %291 = vmatprep.subr.mxu0 0.0
  %292 = vmatpush1.msra.mxu0 %v275
  %293 = vmatprep.subr.mxu0 0.0
  %294 = vmatpush1.msra.mxu0 %v274
  %295 = vmatprep.subr.mxu0 0.0
  %296 = vmatpush1.msra.mxu0 %v273
  %297 = vmatprep.subr.mxu0 0.0
  %298 = vmatpush1.msra.mxu0 %v272
  %299 = vmatprep.subr.mxu0 0.0
  %300 = vmatpush1.msra.mxu0 %v271
  %301 = vmatprep.subr.mxu0 0.0
  %302 = vmatpush1.msra.mxu0 %v270
  %303 = vmatprep.subr.mxu0 0.0
  %304 = vmatpush1.msra.mxu0 %v269
  %305 = vmatprep.subr.mxu0 0.0
  %306 = vmatpush1.msra.mxu0 %v268
  %307 = vmatprep.subr.mxu0 0.0
  %308 = vmatpush1.msra.mxu0 %v267
  %309 = vmatprep.subr.mxu0 0.0
  %310 = vmatpush1.msra.mxu0 %v266
  %311 = vmatprep.subr.mxu0 0.0
  %312 = vmatpush1.msra.mxu0 %v265
  %313 = vmatprep.subr.mxu0 0.0
  %314 = vmatpush2.msra.mxu0 0.0
  %315 = vmatprep.subr.mxu0 0.0
  %316 = vmatpush2.msra.mxu0 0.0
  %317 = vmatprep.subr.mxu0 0.0
  %318 = vmatpush2.msra.mxu0 0.0
  %319 = vmatprep.subr.mxu0 0.0
  %320 = vmatpush2.msra.mxu0 0.0
  %321 = vmatprep.subr.mxu0 0.0
  %322 = vmatpush2.msra.mxu0 0.0
  %323 = vmatprep.subr.mxu0 0.0
  %324 = vmatpush2.msra.mxu0 0.0
  %325 = vmatprep.subr.mxu0 0.0
  %326 = vmatpush2.msra.mxu0 0.0
  %327 = vmatprep.subr.mxu0 0.0
  %328 = vmatpush2.msra.mxu0 0.0
  %329 = vmatprep.subr.mxu0 0.0
  %330 = vmatpush2.msra.mxu0 0.0
  %331 = vmatprep.subr.mxu0 0.0
  %332 = vmatpush2.msra.mxu0 0.0
  %333 = vmatprep.subr.mxu0 0.0
  %334 = vmatpush2.msra.mxu0 0.0
  %335 = vmatprep.subr.mxu0 0.0
  %336 = vmatpush2.msra.mxu0 0.0
  %337 = vmatprep.subr.mxu0 0.0
  %338 = vmatpush2.msra.mxu0 0.0
  %339 = vmatprep.subr.mxu0 0.0
  %340 = vmatpush2.msra.mxu0 0.0
  %341 = vmatprep.subr.mxu0 0.0
  %342 = vmatpush2.msra.mxu0 0.0
  %343 = vmatprep.subr.mxu0 0.0
  %344 = vmatpush2.msra.mxu0 0.0
  %345 = vmatprep.mubr.f32.mxu0 0.0
  %346 = vmatmul.mubr.f32.gmra.mxu0 %v260
  %v347 = vpop.f32.mrf.mxu0
  %v348 = vadd.f32 0.0, %v347
  %v349 = vpop.f32.mrf.mxu0
  %350 = vmatprep.mubr.f32.mxu0 0.0
  %351 = vmatmul.mubr.f32.gmra.mxu0 %v261
  %v352 = vpop.f32.mrf.mxu0
  %v353 = vadd.f32 0.0, %v352
  %v354 = vpop.f32.mrf.mxu0
  %355 = vmatprep.mubr.f32.mxu0 0.0
  %356 = vmatmul.mubr.f32.gmra.mxu0 %v262
  %v357 = vpop.f32.mrf.mxu0
  %v358 = vadd.f32 0.0, %v357
  %v359 = vpop.f32.mrf.mxu0
  %360 = vmatprep.mubr.f32.mxu0 0.0
  %361 = vmatmul.mubr.f32.gmra.mxu0 %v263
  %v362 = vpop.f32.mrf.mxu0
  %v363 = vadd.f32 0.0, %v362
  %v364 = vpop.f32.mrf.mxu0
  %365 = vdwg.mxu0
  %v366 = vadd.f32 %v242, %v348
  %v367 = vadd.f32 %v247, %v353
  %v368 = vadd.f32 %v252, %v358
  %v369 = vadd.f32 %v257, %v363
  %v370 = vld [vmem:[%s2] sm:$0x1]
  %v371 = vld [vmem:[%s3] sm:$0x1]
  %v372 = vadd.f32 %v366, %v367
  %v373 = vadd.f32 %v372, %v368
  %v374 = vadd.f32 %v373, %v369
  %v375 = vrot.slane %v374, 4
  %v376 = vadd.f32 %v374, %v375
  %v377 = vrot.slane %v376, 2
  %v378 = vadd.f32 %v376, %v377
  %v379 = vrot.slane %v378, 1
  %v380 = vadd.f32 %v378, %v379
  %v381 = vmul.f32 %v366, %v366
  %v382 = vmul.f32 %v367, %v367
  %v383 = vmul.f32 %v368, %v368
  %v384 = vmul.f32 %v369, %v369
  %v385 = vadd.f32 %v381, %v382
  %v386 = vadd.f32 %v385, %v383
  %v387 = vadd.f32 %v386, %v384
  %v388 = vrot.slane %v387, 4
  %v389 = vadd.f32 %v387, %v388
  %v390 = vrot.slane %v389, 2
  %v391 = vadd.f32 %v389, %v390
  %v392 = vrot.slane %v391, 1
  %v393 = vadd.f32 %v391, %v392
  %v394 = vld [vmem:[%s7] sm:$0xff]
  %v395 = vld [vmem:[%s7 + $0x8] sm:$0xff]
  %v396 = vld [vmem:[%s7 + $0x10] sm:$0xff]
  %v397 = vld [vmem:[%s7 + $0x18] sm:$0xff]
  %v398 = vld [vmem:[%s7 + $0x20] sm:$0xff]
  %v399 = vld [vmem:[%s7 + $0x28] sm:$0xff]
  %v400 = vld [vmem:[%s7 + $0x30] sm:$0xff]
  %v401 = vld [vmem:[%s7 + $0x38] sm:$0xff]
  %v402 = vld [vmem:[%s7 + $0x40] sm:$0xff]
  %v403 = vld [vmem:[%s7 + $0x48] sm:$0xff]
  %v404 = vld [vmem:[%s7 + $0x50] sm:$0xff]
  %v405 = vld [vmem:[%s7 + $0x58] sm:$0xff]
  %v406 = vld [vmem:[%s7 + $0x60] sm:$0xff]
  %v407 = vld [vmem:[%s7 + $0x68] sm:$0xff]
  %v408 = vld [vmem:[%s7 + $0x70] sm:$0xff]
  %v409 = vld [vmem:[%s7 + $0x78] sm:$0xff]
  %410 = vmatprep.subr.mxu0 0.0
  %411 = vmatpush1.msra.mxu0 %v409
  %412 = vmatprep.subr.mxu0 0.0
  %413 = vmatpush1.msra.mxu0 %v408
  %414 = vmatprep.subr.mxu0 0.0
  %415 = vmatpush1.msra.mxu0 %v407
  %416 = vmatprep.subr.mxu0 0.0
  %417 = vmatpush1.msra.mxu0 %v406
  %418 = vmatprep.subr.mxu0 0.0
  %419 = vmatpush1.msra.mxu0 %v405
  %420 = vmatprep.subr.mxu0 0.0
  %421 = vmatpush1.msra.mxu0 %v404
  %422 = vmatprep.subr.mxu0 0.0
  %423 = vmatpush1.msra.mxu0 %v403
  %424 = vmatprep.subr.mxu0 0.0
  %425 = vmatpush1.msra.mxu0 %v402
  %426 = vmatprep.subr.mxu0 0.0
  %427 = vmatpush1.msra.mxu0 %v401
  %428 = vmatprep.subr.mxu0 0.0
  %429 = vmatpush1.msra.mxu0 %v400
  %430 = vmatprep.subr.mxu0 0.0
  %431 = vmatpush1.msra.mxu0 %v399
  %432 = vmatprep.subr.mxu0 0.0
  %433 = vmatpush1.msra.mxu0 %v398
  %434 = vmatprep.subr.mxu0 0.0
  %435 = vmatpush1.msra.mxu0 %v397
  %436 = vmatprep.subr.mxu0 0.0
  %437 = vmatpush1.msra.mxu0 %v396
  %438 = vmatprep.subr.mxu0 0.0
  %439 = vmatpush1.msra.mxu0 %v395
  %440 = vmatprep.subr.mxu0 0.0
  %441 = vmatpush1.msra.mxu0 %v394
  %442 = vmatprep.subr.mxu0 0.0
  %443 = vmatpush2.msra.mxu0 0.0
  %444 = vmatprep.subr.mxu0 0.0
  %445 = vmatpush2.msra.mxu0 0.0
  %446 = vmatprep.subr.mxu0 0.0
  %447 = vmatpush2.msra.mxu0 0.0
  %448 = vmatprep.subr.mxu0 0.0
  %449 = vmatpush2.msra.mxu0 0.0
  %450 = vmatprep.subr.mxu0 0.0
  %451 = vmatpush2.msra.mxu0 0.0
  %452 = vmatprep.subr.mxu0 0.0
  %453 = vmatpush2.msra.mxu0 0.0
  %454 = vmatprep.subr.mxu0 0.0
  %455 = vmatpush2.msra.mxu0 0.0
  %456 = vmatprep.subr.mxu0 0.0
  %457 = vmatpush2.msra.mxu0 0.0
  %458 = vmatprep.subr.mxu0 0.0
  %459 = vmatpush2.msra.mxu0 0.0
  %460 = vmatprep.subr.mxu0 0.0
  %461 = vmatpush2.msra.mxu0 0.0
  %462 = vmatprep.subr.mxu0 0.0
  %463 = vmatpush2.msra.mxu0 0.0
  %464 = vmatprep.subr.mxu0 0.0
  %465 = vmatpush2.msra.mxu0 0.0
  %466 = vmatprep.subr.mxu0 0.0
  %467 = vmatpush2.msra.mxu0 0.0
  %468 = vmatprep.subr.mxu0 0.0
  %469 = vmatpush2.msra.mxu0 0.0
  %470 = vmatprep.subr.mxu0 0.0
  %471 = vmatpush2.msra.mxu0 0.0
  %472 = vmatprep.subr.mxu0 0.0
  %473 = vmatpush2.msra.mxu0 0.0
  %474 = vmatprep.mubr.f32.mxu0 0.0
  %475 = vmatmul.mubr.f32.gmra.mxu0 %v380
  %v476 = vpop.f32.mrf.mxu0
  %v477 = vadd.f32 0.0, %v476
  %v478 = vpop.f32.mrf.mxu0
  %479 = vdwg.mxu0
  %480 = vmatprep.subr.mxu0 0.0
  %481 = vmatpush1.msra.mxu0 %v409
  %482 = vmatprep.subr.mxu0 0.0
  %483 = vmatpush1.msra.mxu0 %v408
  %484 = vmatprep.subr.mxu0 0.0
  %485 = vmatpush1.msra.mxu0 %v407
  %486 = vmatprep.subr.mxu0 0.0
  %487 = vmatpush1.msra.mxu0 %v406
  %488 = vmatprep.subr.mxu0 0.0
  %489 = vmatpush1.msra.mxu0 %v405
  %490 = vmatprep.subr.mxu0 0.0
  %491 = vmatpush1.msra.mxu0 %v404
  %492 = vmatprep.subr.mxu0 0.0
  %493 = vmatpush1.msra.mxu0 %v403
  %494 = vmatprep.subr.mxu0 0.0
  %495 = vmatpush1.msra.mxu0 %v402
  %496 = vmatprep.subr.mxu0 0.0
  %497 = vmatpush1.msra.mxu0 %v401
  %498 = vmatprep.subr.mxu0 0.0
  %499 = vmatpush1.msra.mxu0 %v400
  %500 = vmatprep.subr.mxu0 0.0
  %501 = vmatpush1.msra.mxu0 %v399
  %502 = vmatprep.subr.mxu0 0.0
  %503 = vmatpush1.msra.mxu0 %v398
  %504 = vmatprep.subr.mxu0 0.0
  %505 = vmatpush1.msra.mxu0 %v397
  %506 = vmatprep.subr.mxu0 0.0
  %507 = vmatpush1.msra.mxu0 %v396
  %508 = vmatprep.subr.mxu0 0.0
  %509 = vmatpush1.msra.mxu0 %v395
  %510 = vmatprep.subr.mxu0 0.0
  %511 = vmatpush1.msra.mxu0 %v394
  %512 = vmatprep.subr.mxu0 0.0
  %513 = vmatpush2.msra.mxu0 0.0
  %514 = vmatprep.subr.mxu0 0.0
  %515 = vmatpush2.msra.mxu0 0.0
  %516 = vmatprep.subr.mxu0 0.0
  %517 = vmatpush2.msra.mxu0 0.0
  %518 = vmatprep.subr.mxu0 0.0
  %519 = vmatpush2.msra.mxu0 0.0
  %520 = vmatprep.subr.mxu0 0.0
  %521 = vmatpush2.msra.mxu0 0.0
  %522 = vmatprep.subr.mxu0 0.0
  %523 = vmatpush2.msra.mxu0 0.0
  %524 = vmatprep.subr.mxu0 0.0
  %525 = vmatpush2.msra.mxu0 0.0
  %526 = vmatprep.subr.mxu0 0.0
  %527 = vmatpush2.msra.mxu0 0.0
  %528 = vmatprep.subr.mxu0 0.0
  %529 = vmatpush2.msra.mxu0 0.0
  %530 = vmatprep.subr.mxu0 0.0
  %531 = vmatpush2.msra.mxu0 0.0
  %532 = vmatprep.subr.mxu0 0.0
  %533 = vmatpush2.msra.mxu0 0.0
  %534 = vmatprep.subr.mxu0 0.0
  %535 = vmatpush2.msra.mxu0 0.0
  %536 = vmatprep.subr.mxu0 0.0
  %537 = vmatpush2.msra.mxu0 0.0
  %538 = vmatprep.subr.mxu0 0.0
  %539 = vmatpush2.msra.mxu0 0.0
  %540 = vmatprep.subr.mxu0 0.0
  %541 = vmatpush2.msra.mxu0 0.0
  %542 = vmatprep.subr.mxu0 0.0
  %543 = vmatpush2.msra.mxu0 0.0
  %544 = vmatprep.mubr.f32.mxu0 0.0
  %545 = vmatmul.mubr.f32.gmra.mxu0 %v393
  %v546 = vpop.f32.mrf.mxu0
  %v547 = vadd.f32 0.0, %v546
  %v548 = vpop.f32.mrf.mxu0
  %549 = vdwg.mxu0
  %v550 = vmul.f32 %v477, %v477
  %v551 = vsub.f32 %v547, %v550
  %v552 = vadd.f32 %v551, 1e-05
  %v553 = vrsqrt.pop %v552
  %v554 = vmul.f32 %v370, %v553
  %v555 = vmul.f32 %v477, %v554
  %v556 = vsub.f32 %v371, %v555
  %v558 = vlaneseq
  %v559 = vshrl.u32 %v558, 7
  %v560 = vsub.s32 0, %v559
  %v561 = vrot.slane %v554, %v560
  %v563 = vmul.f32 %v366, %v561
  %v564 = vmul.f32 %v367, %v561
  %v565 = vmul.f32 %v368, %v561
  %v566 = vmul.f32 %v369, %v561
  %v568 = vlaneseq
  %v569 = vshrl.u32 %v568, 7
  %v570 = vsub.s32 0, %v569
  %v571 = vrot.slane %v556, %v570
  %v573 = vadd.f32 %v563, %v571
  %v574 = vadd.f32 %v564, %v571
  %v575 = vadd.f32 %v565, %v571
  %v576 = vadd.f32 %v566, %v571
  %v577 = vmax.f32 %v573, 0.0
  %v578 = vmax.f32 %v574, 0.0
  %v579 = vmax.f32 %v575, 0.0
  %v580 = vmax.f32 %v576, 0.0
  %581 = vst [vmem:[#allocation3] sm:$0x1] 0.0
  %582 = vst [vmem:[#allocation3 + $0x18] sm:$0x1] 0.0
  %583 = vst [vmem:[#allocation3 + $0x11] sm:$0x1] 0.0
  %584 = vst [vmem:[#allocation3 + $0x29] sm:$0x1] 0.0
  %585 = vst [vmem:[#allocation3 + $0x1] sm:$0xff] %v577
  %586 = vst [vmem:[#allocation3 + $0x9] sm:$0xff] %v578
  %587 = vst [vmem:[#allocation3 + $0x19] sm:$0xff] %v579
  %588 = vst [vmem:[#allocation3 + $0x21] sm:$0xff] %v580
  %v589 = vld [vmem:[#allocation3] sm:$0xff]
  %v590 = vld [vmem:[#allocation3 + $0x8] sm:$0xff]
  %v591 = vld [vmem:[#allocation3 + $0x18] sm:$0xff]
  %v592 = vld [vmem:[#allocation3 + $0x20] sm:$0xff]
  %v593 = vld [vmem:[%s4] sm:$0xff]
  %v594 = vld [vmem:[%s4 + $0x8] sm:$0xff]
  %v595 = vld [vmem:[%s4 + $0x10] sm:$0xff]
  %v596 = vld [vmem:[%s4 + $0x18] sm:$0xff]
  %v597 = vld [vmem:[%s4 + $0x20] sm:$0xff]
  %v598 = vld [vmem:[%s4 + $0x28] sm:$0xff]
  %v599 = vld [vmem:[%s4 + $0x30] sm:$0xff]
  %v600 = vld [vmem:[%s4 + $0x38] sm:$0xff]
  %v601 = vld [vmem:[%s4 + $0x40] sm:$0xff]
  %v602 = vld [vmem:[%s4 + $0x48] sm:$0xff]
  %v603 = vld [vmem:[%s4 + $0x50] sm:$0xff]
  %v604 = vld [vmem:[%s4 + $0x58] sm:$0xff]
  %v605 = vld [vmem:[%s4 + $0x60] sm:$0xff]
  %v606 = vld [vmem:[%s4 + $0x68] sm:$0xff]
  %v607 = vld [vmem:[%s4 + $0x70] sm:$0xff]
  %v608 = vld [vmem:[%s4 + $0x78] sm:$0xff]
  %v609 = vld [vmem:[#allocation3 + $0x1] sm:$0xff]
  %v610 = vld [vmem:[#allocation3 + $0x9] sm:$0xff]
  %v611 = vld [vmem:[#allocation3 + $0x19] sm:$0xff]
  %v612 = vld [vmem:[#allocation3 + $0x21] sm:$0xff]
  %s613 = scalar_lea.vmem %s4, 128
  %v614 = vld [vmem:[%s613] sm:$0xff]
  %v615 = vld [vmem:[%s613 + $0x8] sm:$0xff]
  %v616 = vld [vmem:[%s613 + $0x10] sm:$0xff]
  %v617 = vld [vmem:[%s613 + $0x18] sm:$0xff]
  %v618 = vld [vmem:[%s613 + $0x20] sm:$0xff]
  %v619 = vld [vmem:[%s613 + $0x28] sm:$0xff]
  %v620 = vld [vmem:[%s613 + $0x30] sm:$0xff]
  %v621 = vld [vmem:[%s613 + $0x38] sm:$0xff]
  %v622 = vld [vmem:[%s613 + $0x40] sm:$0xff]
  %v623 = vld [vmem:[%s613 + $0x48] sm:$0xff]
  %v624 = vld [vmem:[%s613 + $0x50] sm:$0xff]
  %v625 = vld [vmem:[%s613 + $0x58] sm:$0xff]
  %v626 = vld [vmem:[%s613 + $0x60] sm:$0xff]
  %v627 = vld [vmem:[%s613 + $0x68] sm:$0xff]
  %v628 = vld [vmem:[%s613 + $0x70] sm:$0xff]
  %v629 = vld [vmem:[%s613 + $0x78] sm:$0xff]
  %630 = vmatprep.subr.mxu0 0.0
  %631 = vmatpush1.msra.mxu0 %v629
  %632 = vmatprep.subr.mxu0 0.0
  %633 = vmatpush1.msra.mxu0 %v628
  %634 = vmatprep.subr.mxu0 0.0
  %635 = vmatpush1.msra.mxu0 %v627
  %636 = vmatprep.subr.mxu0 0.0
  %637 = vmatpush1.msra.mxu0 %v626
  %638 = vmatprep.subr.mxu0 0.0
  %639 = vmatpush1.msra.mxu0 %v625
  %640 = vmatprep.subr.mxu0 0.0
  %641 = vmatpush1.msra.mxu0 %v624
  %642 = vmatprep.subr.mxu0 0.0
  %643 = vmatpush1.msra.mxu0 %v623
  %644 = vmatprep.subr.mxu0 0.0
  %645 = vmatpush1.msra.mxu0 %v622
  %646 = vmatprep.subr.mxu0 0.0
  %647 = vmatpush1.msra.mxu0 %v621
  %648 = vmatprep.subr.mxu0 0.0
  %649 = vmatpush1.msra.mxu0 %v620
  %650 = vmatprep.subr.mxu0 0.0
  %651 = vmatpush1.msra.mxu0 %v619
  %652 = vmatprep.subr.mxu0 0.0
  %653 = vmatpush1.msra.mxu0 %v618
  %654 = vmatprep.subr.mxu0 0.0
  %655 = vmatpush1.msra.mxu0 %v617
  %656 = vmatprep.subr.mxu0 0.0
  %657 = vmatpush1.msra.mxu0 %v616
  %658 = vmatprep.subr.mxu0 0.0
  %659 = vmatpush1.msra.mxu0 %v615
  %660 = vmatprep.subr.mxu0 0.0
  %661 = vmatpush1.msra.mxu0 %v614
  %662 = vmatprep.subr.mxu0 0.0
  %663 = vmatpush2.msra.mxu0 0.0
  %664 = vmatprep.subr.mxu0 0.0
  %665 = vmatpush2.msra.mxu0 0.0
  %666 = vmatprep.subr.mxu0 0.0
  %667 = vmatpush2.msra.mxu0 0.0
  %668 = vmatprep.subr.mxu0 0.0
  %669 = vmatpush2.msra.mxu0 0.0
  %670 = vmatprep.subr.mxu0 0.0
  %671 = vmatpush2.msra.mxu0 0.0
  %672 = vmatprep.subr.mxu0 0.0
  %673 = vmatpush2.msra.mxu0 0.0
  %674 = vmatprep.subr.mxu0 0.0
  %675 = vmatpush2.msra.mxu0 0.0
  %676 = vmatprep.subr.mxu0 0.0
  %677 = vmatpush2.msra.mxu0 0.0
  %678 = vmatprep.subr.mxu0 0.0
  %679 = vmatpush2.msra.mxu0 0.0
  %680 = vmatprep.subr.mxu0 0.0
  %681 = vmatpush2.msra.mxu0 0.0
  %682 = vmatprep.subr.mxu0 0.0
  %683 = vmatpush2.msra.mxu0 0.0
  %684 = vmatprep.subr.mxu0 0.0
  %685 = vmatpush2.msra.mxu0 0.0
  %686 = vmatprep.subr.mxu0 0.0
  %687 = vmatpush2.msra.mxu0 0.0
  %688 = vmatprep.subr.mxu0 0.0
  %689 = vmatpush2.msra.mxu0 0.0
  %690 = vmatprep.subr.mxu0 0.0
  %691 = vmatpush2.msra.mxu0 0.0
  %692 = vmatprep.subr.mxu0 0.0
  %693 = vmatpush2.msra.mxu0 0.0
  %694 = vmatprep.mubr.f32.mxu0 0.0
  %695 = vmatmul.mubr.f32.gmra.mxu0 %v609
  %v696 = vpop.f32.mrf.mxu0
  %v697 = vadd.f32 0.0, %v696
  %v698 = vpop.f32.mrf.mxu0
  %699 = vmatprep.mubr.f32.mxu0 0.0
  %700 = vmatmul.mubr.f32.gmra.mxu0 %v610
  %v701 = vpop.f32.mrf.mxu0
  %v702 = vadd.f32 0.0, %v701
  %v703 = vpop.f32.mrf.mxu0
  %704 = vmatprep.mubr.f32.mxu0 0.0
  %705 = vmatmul.mubr.f32.gmra.mxu0 %v611
  %v706 = vpop.f32.mrf.mxu0
  %v707 = vadd.f32 0.0, %v706
  %v708 = vpop.f32.mrf.mxu0
  %709 = vmatprep.mubr.f32.mxu0 0.0
  %710 = vmatmul.mubr.f32.gmra.mxu0 %v612
  %v711 = vpop.f32.mrf.mxu0
  %v712 = vadd.f32 0.0, %v711
  %v713 = vpop.f32.mrf.mxu0
  %714 = vdwg.mxu0
  %715 = vmatprep.subr.mxu0 0.0
  %716 = vmatpush1.msra.mxu0 %v608
  %717 = vmatprep.subr.mxu0 0.0
  %718 = vmatpush1.msra.mxu0 %v607
  %719 = vmatprep.subr.mxu0 0.0
  %720 = vmatpush1.msra.mxu0 %v606
  %721 = vmatprep.subr.mxu0 0.0
  %722 = vmatpush1.msra.mxu0 %v605
  %723 = vmatprep.subr.mxu0 0.0
  %724 = vmatpush1.msra.mxu0 %v604
  %725 = vmatprep.subr.mxu0 0.0
  %726 = vmatpush1.msra.mxu0 %v603
  %727 = vmatprep.subr.mxu0 0.0
  %728 = vmatpush1.msra.mxu0 %v602
  %729 = vmatprep.subr.mxu0 0.0
  %730 = vmatpush1.msra.mxu0 %v601
  %731 = vmatprep.subr.mxu0 0.0
  %732 = vmatpush1.msra.mxu0 %v600
  %733 = vmatprep.subr.mxu0 0.0
  %734 = vmatpush1.msra.mxu0 %v599
  %735 = vmatprep.subr.mxu0 0.0
  %736 = vmatpush1.msra.mxu0 %v598
  %737 = vmatprep.subr.mxu0 0.0
  %738 = vmatpush1.msra.mxu0 %v597
  %739 = vmatprep.subr.mxu0 0.0
  %740 = vmatpush1.msra.mxu0 %v596
  %741 = vmatprep.subr.mxu0 0.0
  %742 = vmatpush1.msra.mxu0 %v595
  %743 = vmatprep.subr.mxu0 0.0
  %744 = vmatpush1.msra.mxu0 %v594
  %745 = vmatprep.subr.mxu0 0.0
  %746 = vmatpush1.msra.mxu0 %v593
  %747 = vmatprep.subr.mxu0 0.0
  %748 = vmatpush2.msra.mxu0 0.0
  %749 = vmatprep.subr.mxu0 0.0
  %750 = vmatpush2.msra.mxu0 0.0
  %751 = vmatprep.subr.mxu0 0.0
  %752 = vmatpush2.msra.mxu0 0.0
  %753 = vmatprep.subr.mxu0 0.0
  %754 = vmatpush2.msra.mxu0 0.0
  %755 = vmatprep.subr.mxu0 0.0
  %756 = vmatpush2.msra.mxu0 0.0
  %757 = vmatprep.subr.mxu0 0.0
  %758 = vmatpush2.msra.mxu0 0.0
  %759 = vmatprep.subr.mxu0 0.0
  %760 = vmatpush2.msra.mxu0 0.0
  %761 = vmatprep.subr.mxu0 0.0
  %762 = vmatpush2.msra.mxu0 0.0
  %763 = vmatprep.subr.mxu0 0.0
  %764 = vmatpush2.msra.mxu0 0.0
  %765 = vmatprep.subr.mxu0 0.0
  %766 = vmatpush2.msra.mxu0 0.0
  %767 = vmatprep.subr.mxu0 0.0
  %768 = vmatpush2.msra.mxu0 0.0
  %769 = vmatprep.subr.mxu0 0.0
  %770 = vmatpush2.msra.mxu0 0.0
  %771 = vmatprep.subr.mxu0 0.0
  %772 = vmatpush2.msra.mxu0 0.0
  %773 = vmatprep.subr.mxu0 0.0
  %774 = vmatpush2.msra.mxu0 0.0
  %775 = vmatprep.subr.mxu0 0.0
  %776 = vmatpush2.msra.mxu0 0.0
  %777 = vmatprep.subr.mxu0 0.0
  %778 = vmatpush2.msra.mxu0 0.0
  %779 = vmatprep.mubr.f32.mxu0 0.0
  %780 = vmatmul.mubr.f32.gmra.mxu0 %v589
  %v781 = vpop.f32.mrf.mxu0
  %v782 = vadd.f32 %v697, %v781
  %v783 = vpop.f32.mrf.mxu0
  %784 = vmatprep.mubr.f32.mxu0 0.0
  %785 = vmatmul.mubr.f32.gmra.mxu0 %v590
  %v786 = vpop.f32.mrf.mxu0
  %v787 = vadd.f32 %v702, %v786
  %v788 = vpop.f32.mrf.mxu0
  %789 = vmatprep.mubr.f32.mxu0 0.0
  %790 = vmatmul.mubr.f32.gmra.mxu0 %v591
  %v791 = vpop.f32.mrf.mxu0
  %v792 = vadd.f32 %v707, %v791
  %v793 = vpop.f32.mrf.mxu0
  %794 = vmatprep.mubr.f32.mxu0 0.0
  %795 = vmatmul.mubr.f32.gmra.mxu0 %v592
  %v796 = vpop.f32.mrf.mxu0
  %v797 = vadd.f32 %v712, %v796
  %v798 = vpop.f32.mrf.mxu0
  %799 = vdwg.mxu0
  %v800 = vld [vmem:[#allocation3 + $0x2] sm:$0xff]
  %v801 = vld [vmem:[#allocation3 + $0xa] sm:$0xff]
  %v802 = vld [vmem:[#allocation3 + $0x1a] sm:$0xff]
  %v803 = vld [vmem:[#allocation3 + $0x22] sm:$0xff]
  %s804 = scalar_lea.vmem %s4, 256
  %v805 = vld [vmem:[%s804] sm:$0xff]
  %v806 = vld [vmem:[%s804 + $0x8] sm:$0xff]
  %v807 = vld [vmem:[%s804 + $0x10] sm:$0xff]
  %v808 = vld [vmem:[%s804 + $0x18] sm:$0xff]
  %v809 = vld [vmem:[%s804 + $0x20] sm:$0xff]
  %v810 = vld [vmem:[%s804 + $0x28] sm:$0xff]
  %v811 = vld [vmem:[%s804 + $0x30] sm:$0xff]
  %v812 = vld [vmem:[%s804 + $0x38] sm:$0xff]
  %v813 = vld [vmem:[%s804 + $0x40] sm:$0xff]
  %v814 = vld [vmem:[%s804 + $0x48] sm:$0xff]
  %v815 = vld [vmem:[%s804 + $0x50] sm:$0xff]
  %v816 = vld [vmem:[%s804 + $0x58] sm:$0xff]
  %v817 = vld [vmem:[%s804 + $0x60] sm:$0xff]
  %v818 = vld [vmem:[%s804 + $0x68] sm:$0xff]
  %v819 = vld [vmem:[%s804 + $0x70] sm:$0xff]
  %v820 = vld [vmem:[%s804 + $0x78] sm:$0xff]
  %821 = vmatprep.subr.mxu0 0.0
  %822 = vmatpush1.msra.mxu0 %v820
  %823 = vmatprep.subr.mxu0 0.0
  %824 = vmatpush1.msra.mxu0 %v819
  %825 = vmatprep.subr.mxu0 0.0
  %826 = vmatpush1.msra.mxu0 %v818
  %827 = vmatprep.subr.mxu0 0.0
  %828 = vmatpush1.msra.mxu0 %v817
  %829 = vmatprep.subr.mxu0 0.0
  %830 = vmatpush1.msra.mxu0 %v816
  %831 = vmatprep.subr.mxu0 0.0
  %832 = vmatpush1.msra.mxu0 %v815
  %833 = vmatprep.subr.mxu0 0.0
  %834 = vmatpush1.msra.mxu0 %v814
  %835 = vmatprep.subr.mxu0 0.0
  %836 = vmatpush1.msra.mxu0 %v813
  %837 = vmatprep.subr.mxu0 0.0
  %838 = vmatpush1.msra.mxu0 %v812
  %839 = vmatprep.subr.mxu0 0.0
  %840 = vmatpush1.msra.mxu0 %v811
  %841 = vmatprep.subr.mxu0 0.0
  %842 = vmatpush1.msra.mxu0 %v810
  %843 = vmatprep.subr.mxu0 0.0
  %844 = vmatpush1.msra.mxu0 %v809
  %845 = vmatprep.subr.mxu0 0.0
  %846 = vmatpush1.msra.mxu0 %v808
  %847 = vmatprep.subr.mxu0 0.0
  %848 = vmatpush1.msra.mxu0 %v807
  %849 = vmatprep.subr.mxu0 0.0
  %850 = vmatpush1.msra.mxu0 %v806
  %851 = vmatprep.subr.mxu0 0.0
  %852 = vmatpush1.msra.mxu0 %v805
  %853 = vmatprep.subr.mxu0 0.0
  %854 = vmatpush2.msra.mxu0 0.0
  %855 = vmatprep.subr.mxu0 0.0
  %856 = vmatpush2.msra.mxu0 0.0
  %857 = vmatprep.subr.mxu0 0.0
  %858 = vmatpush2.msra.mxu0 0.0
  %859 = vmatprep.subr.mxu0 0.0
  %860 = vmatpush2.msra.mxu0 0.0
  %861 = vmatprep.subr.mxu0 0.0
  %862 = vmatpush2.msra.mxu0 0.0
  %863 = vmatprep.subr.mxu0 0.0
  %864 = vmatpush2.msra.mxu0 0.0
  %865 = vmatprep.subr.mxu0 0.0
  %866 = vmatpush2.msra.mxu0 0.0
  %867 = vmatprep.subr.mxu0 0.0
  %868 = vmatpush2.msra.mxu0 0.0
  %869 = vmatprep.subr.mxu0 0.0
  %870 = vmatpush2.msra.mxu0 0.0
  %871 = vmatprep.subr.mxu0 0.0
  %872 = vmatpush2.msra.mxu0 0.0
  %873 = vmatprep.subr.mxu0 0.0
  %874 = vmatpush2.msra.mxu0 0.0
  %875 = vmatprep.subr.mxu0 0.0
  %876 = vmatpush2.msra.mxu0 0.0
  %877 = vmatprep.subr.mxu0 0.0
  %878 = vmatpush2.msra.mxu0 0.0
  %879 = vmatprep.subr.mxu0 0.0
  %880 = vmatpush2.msra.mxu0 0.0
  %881 = vmatprep.subr.mxu0 0.0
  %882 = vmatpush2.msra.mxu0 0.0
  %883 = vmatprep.subr.mxu0 0.0
  %884 = vmatpush2.msra.mxu0 0.0
  %885 = vmatprep.mubr.f32.mxu0 0.0
  %886 = vmatmul.mubr.f32.gmra.mxu0 %v800
  %v887 = vpop.f32.mrf.mxu0
  %v888 = vadd.f32 0.0, %v887
  %v889 = vpop.f32.mrf.mxu0
  %890 = vmatprep.mubr.f32.mxu0 0.0
  %891 = vmatmul.mubr.f32.gmra.mxu0 %v801
  %v892 = vpop.f32.mrf.mxu0
  %v893 = vadd.f32 0.0, %v892
  %v894 = vpop.f32.mrf.mxu0
  %895 = vmatprep.mubr.f32.mxu0 0.0
  %896 = vmatmul.mubr.f32.gmra.mxu0 %v802
  %v897 = vpop.f32.mrf.mxu0
  %v898 = vadd.f32 0.0, %v897
  %v899 = vpop.f32.mrf.mxu0
  %900 = vmatprep.mubr.f32.mxu0 0.0
  %901 = vmatmul.mubr.f32.gmra.mxu0 %v803
  %v902 = vpop.f32.mrf.mxu0
  %v903 = vadd.f32 0.0, %v902
  %v904 = vpop.f32.mrf.mxu0
  %905 = vdwg.mxu0
  %v906 = vadd.f32 %v782, %v888
  %v907 = vadd.f32 %v787, %v893
  %v908 = vadd.f32 %v792, %v898
  %v909 = vadd.f32 %v797, %v903
  %v910 = vld [vmem:[%s5] sm:$0x1]
  %v911 = vld [vmem:[%s6] sm:$0x1]
  %v912 = vadd.f32 %v906, %v907
  %v913 = vadd.f32 %v912, %v908
  %v914 = vadd.f32 %v913, %v909
  %v915 = vrot.slane %v914, 4
  %v916 = vadd.f32 %v914, %v915
  %v917 = vrot.slane %v916, 2
  %v918 = vadd.f32 %v916, %v917
  %v919 = vrot.slane %v918, 1
  %v920 = vadd.f32 %v918, %v919
  %v921 = vmul.f32 %v906, %v906
  %v922 = vmul.f32 %v907, %v907
  %v923 = vmul.f32 %v908, %v908
  %v924 = vmul.f32 %v909, %v909
  %v925 = vadd.f32 %v921, %v922
  %v926 = vadd.f32 %v925, %v923
  %v927 = vadd.f32 %v926, %v924
  %v928 = vrot.slane %v927, 4
  %v929 = vadd.f32 %v927, %v928
  %v930 = vrot.slane %v929, 2
  %v931 = vadd.f32 %v929, %v930
  %v932 = vrot.slane %v931, 1
  %v933 = vadd.f32 %v931, %v932
  %v934 = vld [vmem:[%s7] sm:$0xff]
  %v935 = vld [vmem:[%s7 + $0x8] sm:$0xff]
  %v936 = vld [vmem:[%s7 + $0x10] sm:$0xff]
  %v937 = vld [vmem:[%s7 + $0x18] sm:$0xff]
  %v938 = vld [vmem:[%s7 + $0x20] sm:$0xff]
  %v939 = vld [vmem:[%s7 + $0x28] sm:$0xff]
  %v940 = vld [vmem:[%s7 + $0x30] sm:$0xff]
  %v941 = vld [vmem:[%s7 + $0x38] sm:$0xff]
  %v942 = vld [vmem:[%s7 + $0x40] sm:$0xff]
  %v943 = vld [vmem:[%s7 + $0x48] sm:$0xff]
  %v944 = vld [vmem:[%s7 + $0x50] sm:$0xff]
  %v945 = vld [vmem:[%s7 + $0x58] sm:$0xff]
  %v946 = vld [vmem:[%s7 + $0x60] sm:$0xff]
  %v947 = vld [vmem:[%s7 + $0x68] sm:$0xff]
  %v948 = vld [vmem:[%s7 + $0x70] sm:$0xff]
  %v949 = vld [vmem:[%s7 + $0x78] sm:$0xff]
  %950 = vmatprep.subr.mxu0 0.0
  %951 = vmatpush1.msra.mxu0 %v949
  %952 = vmatprep.subr.mxu0 0.0
  %953 = vmatpush1.msra.mxu0 %v948
  %954 = vmatprep.subr.mxu0 0.0
  %955 = vmatpush1.msra.mxu0 %v947
  %956 = vmatprep.subr.mxu0 0.0
  %957 = vmatpush1.msra.mxu0 %v946
  %958 = vmatprep.subr.mxu0 0.0
  %959 = vmatpush1.msra.mxu0 %v945
  %960 = vmatprep.subr.mxu0 0.0
  %961 = vmatpush1.msra.mxu0 %v944
  %962 = vmatprep.subr.mxu0 0.0
  %963 = vmatpush1.msra.mxu0 %v943
  %964 = vmatprep.subr.mxu0 0.0
  %965 = vmatpush1.msra.mxu0 %v942
  %966 = vmatprep.subr.mxu0 0.0
  %967 = vmatpush1.msra.mxu0 %v941
  %968 = vmatprep.subr.mxu0 0.0
  %969 = vmatpush1.msra.mxu0 %v940
  %970 = vmatprep.subr.mxu0 0.0
  %971 = vmatpush1.msra.mxu0 %v939
  %972 = vmatprep.subr.mxu0 0.0
  %973 = vmatpush1.msra.mxu0 %v938
  %974 = vmatprep.subr.mxu0 0.0
  %975 = vmatpush1.msra.mxu0 %v937
  %976 = vmatprep.subr.mxu0 0.0
  %977 = vmatpush1.msra.mxu0 %v936
  %978 = vmatprep.subr.mxu0 0.0
  %979 = vmatpush1.msra.mxu0 %v935
  %980 = vmatprep.subr.mxu0 0.0
  %981 = vmatpush1.msra.mxu0 %v934
  %982 = vmatprep.subr.mxu0 0.0
  %983 = vmatpush2.msra.mxu0 0.0
  %984 = vmatprep.subr.mxu0 0.0
  %985 = vmatpush2.msra.mxu0 0.0
  %986 = vmatprep.subr.mxu0 0.0
  %987 = vmatpush2.msra.mxu0 0.0
  %988 = vmatprep.subr.mxu0 0.0
  %989 = vmatpush2.msra.mxu0 0.0
  %990 = vmatprep.subr.mxu0 0.0
  %991 = vmatpush2.msra.mxu0 0.0
  %992 = vmatprep.subr.mxu0 0.0
  %993 = vmatpush2.msra.mxu0 0.0
  %994 = vmatprep.subr.mxu0 0.0
  %995 = vmatpush2.msra.mxu0 0.0
  %996 = vmatprep.subr.mxu0 0.0
  %997 = vmatpush2.msra.mxu0 0.0
  %998 = vmatprep.subr.mxu0 0.0
  %999 = vmatpush2.msra.mxu0 0.0
  %1000 = vmatprep.subr.mxu0 0.0
  %1001 = vmatpush2.msra.mxu0 0.0
  %1002 = vmatprep.subr.mxu0 0.0
  %1003 = vmatpush2.msra.mxu0 0.0
  %1004 = vmatprep.subr.mxu0 0.0
  %1005 = vmatpush2.msra.mxu0 0.0
  %1006 = vmatprep.subr.mxu0 0.0
  %1007 = vmatpush2.msra.mxu0 0.0
  %1008 = vmatprep.subr.mxu0 0.0
  %1009 = vmatpush2.msra.mxu0 0.0
  %1010 = vmatprep.subr.mxu0 0.0
  %1011 = vmatpush2.msra.mxu0 0.0
  %1012 = vmatprep.subr.mxu0 0.0
  %1013 = vmatpush2.msra.mxu0 0.0
  %1014 = vmatprep.mubr.f32.mxu0 0.0
  %1015 = vmatmul.mubr.f32.gmra.mxu0 %v920
  %v1016 = vpop.f32.mrf.mxu0
  %v1017 = vadd.f32 0.0, %v1016
  %v1018 = vpop.f32.mrf.mxu0
  %1019 = vdwg.mxu0
  %1020 = vmatprep.subr.mxu0 0.0
  %1021 = vmatpush1.msra.mxu0 %v949
  %1022 = vmatprep.subr.mxu0 0.0
  %1023 = vmatpush1.msra.mxu0 %v948
  %1024 = vmatprep.subr.mxu0 0.0
  %1025 = vmatpush1.msra.mxu0 %v947
  %1026 = vmatprep.subr.mxu0 0.0
  %1027 = vmatpush1.msra.mxu0 %v946
  %1028 = vmatprep.subr.mxu0 0.0
  %1029 = vmatpush1.msra.mxu0 %v945
  %1030 = vmatprep.subr.mxu0 0.0
  %1031 = vmatpush1.msra.mxu0 %v944
  %1032 = vmatprep.subr.mxu0 0.0
  %1033 = vmatpush1.msra.mxu0 %v943
  %1034 = vmatprep.subr.mxu0 0.0
  %1035 = vmatpush1.msra.mxu0 %v942
  %1036 = vmatprep.subr.mxu0 0.0
  %1037 = vmatpush1.msra.mxu0 %v941
  %1038 = vmatprep.subr.mxu0 0.0
  %1039 = vmatpush1.msra.mxu0 %v940
  %1040 = vmatprep.subr.mxu0 0.0
  %1041 = vmatpush1.msra.mxu0 %v939
  %1042 = vmatprep.subr.mxu0 0.0
  %1043 = vmatpush1.msra.mxu0 %v938
  %1044 = vmatprep.subr.mxu0 0.0
  %1045 = vmatpush1.msra.mxu0 %v937
  %1046 = vmatprep.subr.mxu0 0.0
  %1047 = vmatpush1.msra.mxu0 %v936
  %1048 = vmatprep.subr.mxu0 0.0
  %1049 = vmatpush1.msra.mxu0 %v935
  %1050 = vmatprep.subr.mxu0 0.0
  %1051 = vmatpush1.msra.mxu0 %v934
  %1052 = vmatprep.subr.mxu0 0.0
  %1053 = vmatpush2.msra.mxu0 0.0
  %1054 = vmatprep.subr.mxu0 0.0
  %1055 = vmatpush2.msra.mxu0 0.0
  %1056 = vmatprep.subr.mxu0 0.0
  %1057 = vmatpush2.msra.mxu0 0.0
  %1058 = vmatprep.subr.mxu0 0.0
  %1059 = vmatpush2.msra.mxu0 0.0
  %1060 = vmatprep.subr.mxu0 0.0
  %1061 = vmatpush2.msra.mxu0 0.0
  %1062 = vmatprep.subr.mxu0 0.0
  %1063 = vmatpush2.msra.mxu0 0.0
  %1064 = vmatprep.subr.mxu0 0.0
  %1065 = vmatpush2.msra.mxu0 0.0
  %1066 = vmatprep.subr.mxu0 0.0
  %1067 = vmatpush2.msra.mxu0 0.0
  %1068 = vmatprep.subr.mxu0 0.0
  %1069 = vmatpush2.msra.mxu0 0.0
  %1070 = vmatprep.subr.mxu0 0.0
  %1071 = vmatpush2.msra.mxu0 0.0
  %1072 = vmatprep.subr.mxu0 0.0
  %1073 = vmatpush2.msra.mxu0 0.0
  %1074 = vmatprep.subr.mxu0 0.0
  %1075 = vmatpush2.msra.mxu0 0.0
  %1076 = vmatprep.subr.mxu0 0.0
  %1077 = vmatpush2.msra.mxu0 0.0
  %1078 = vmatprep.subr.mxu0 0.0
  %1079 = vmatpush2.msra.mxu0 0.0
  %1080 = vmatprep.subr.mxu0 0.0
  %1081 = vmatpush2.msra.mxu0 0.0
  %1082 = vmatprep.subr.mxu0 0.0
  %1083 = vmatpush2.msra.mxu0 0.0
  %1084 = vmatprep.mubr.f32.mxu0 0.0
  %1085 = vmatmul.mubr.f32.gmra.mxu0 %v933
  %v1086 = vpop.f32.mrf.mxu0
  %v1087 = vadd.f32 0.0, %v1086
  %v1088 = vpop.f32.mrf.mxu0
  %1089 = vdwg.mxu0
  %v1090 = vmul.f32 %v1017, %v1017
  %v1091 = vsub.f32 %v1087, %v1090
  %v1092 = vadd.f32 %v1091, 1e-05
  %v1093 = vrsqrt.pop %v1092
  %v1094 = vmul.f32 %v910, %v1093
  %v1095 = vmul.f32 %v1017, %v1094
  %v1096 = vsub.f32 %v911, %v1095
  %v1098 = vlaneseq
  %v1099 = vshrl.u32 %v1098, 7
  %v1100 = vsub.s32 0, %v1099
  %v1101 = vrot.slane %v1094, %v1100
  %v1103 = vmul.f32 %v906, %v1101
  %v1104 = vmul.f32 %v907, %v1101
  %v1105 = vmul.f32 %v908, %v1101
  %v1106 = vmul.f32 %v909, %v1101
  %v1108 = vlaneseq
  %v1109 = vshrl.u32 %v1108, 7
  %v1110 = vsub.s32 0, %v1109
  %v1111 = vrot.slane %v1096, %v1110
  %v1113 = vadd.f32 %v1103, %v1111
  %v1114 = vadd.f32 %v1104, %v1111
  %v1115 = vadd.f32 %v1105, %v1111
  %v1116 = vadd.f32 %v1106, %v1111
  %v1117 = vmax.f32 %v1113, 0.0
  %v1118 = vmax.f32 %v1114, 0.0
  %v1119 = vmax.f32 %v1115, 0.0
  %v1120 = vmax.f32 %v1116, 0.0
  %1121 = vst [vmem:[%s10] sm:$0xff] %v1117
  %1122 = vst [vmem:[%s10 + $0x8] sm:$0xff] %v1118
  %1123 = vst [vmem:[%s10 + $0x10] sm:$0xff] %v1119
  %1124 = vst [vmem:[%s10 + $0x18] sm:$0xff] %v1120
  %v1125 = vld [vmem:[%s8] sm:$0xff]
  %v1126 = vld [vmem:[%s8 + $0x8] sm:$0xff]
  %v1127 = vld [vmem:[%s8 + $0x10] sm:$0xff]
  %v1128 = vld [vmem:[%s8 + $0x18] sm:$0xff]
  %v1129 = vld [vmem:[%s8 + $0x20] sm:$0xff]
  %v1130 = vld [vmem:[%s8 + $0x28] sm:$0xff]
  %v1131 = vld [vmem:[%s8 + $0x30] sm:$0xff]
  %v1132 = vld [vmem:[%s8 + $0x38] sm:$0xff]
  %v1133 = vld [vmem:[%s8 + $0x40] sm:$0xff]
  %v1134 = vld [vmem:[%s8 + $0x48] sm:$0xff]
  %v1135 = vld [vmem:[%s8 + $0x50] sm:$0xff]
  %v1136 = vld [vmem:[%s8 + $0x58] sm:$0xff]
  %v1137 = vld [vmem:[%s8 + $0x60] sm:$0xff]
  %v1138 = vld [vmem:[%s8 + $0x68] sm:$0xff]
  %v1139 = vld [vmem:[%s8 + $0x70] sm:$0xff]
  %v1140 = vld [vmem:[%s8 + $0x78] sm:$0xff]
  %v1141 = vld [vmem:[%s9] sm:$0x1]
  %v1143 = vlaneseq
  %v1144 = vshrl.u32 %v1143, 7
  %v1145 = vsub.s32 0, %v1144
  %v1146 = vrot.slane %v1141, %v1145
  %1148 = vmatprep.subr.mxu0 0.0
  %1149 = vmatpush1.msra.mxu0 %v1140
  %1150 = vmatprep.subr.mxu0 0.0
  %1151 = vmatpush1.msra.mxu0 %v1139
  %1152 = vmatprep.subr.mxu0 0.0
  %1153 = vmatpush1.msra.mxu0 %v1138
  %1154 = vmatprep.subr.mxu0 0.0
  %1155 = vmatpush1.msra.mxu0 %v1137
  %1156 = vmatprep.subr.mxu0 0.0
  %1157 = vmatpush1.msra.mxu0 %v1136
  %1158 = vmatprep.subr.mxu0 0.0
  %1159 = vmatpush1.msra.mxu0 %v1135
  %1160 = vmatprep.subr.mxu0 0.0
  %1161 = vmatpush1.msra.mxu0 %v1134
  %1162 = vmatprep.subr.mxu0 0.0
  %1163 = vmatpush1.msra.mxu0 %v1133
  %1164 = vmatprep.subr.mxu0 0.0
  %1165 = vmatpush1.msra.mxu0 %v1132
  %1166 = vmatprep.subr.mxu0 0.0
  %1167 = vmatpush1.msra.mxu0 %v1131
  %1168 = vmatprep.subr.mxu0 0.0
  %1169 = vmatpush1.msra.mxu0 %v1130
  %1170 = vmatprep.subr.mxu0 0.0
  %1171 = vmatpush1.msra.mxu0 %v1129
  %1172 = vmatprep.subr.mxu0 0.0
  %1173 = vmatpush1.msra.mxu0 %v1128
  %1174 = vmatprep.subr.mxu0 0.0
  %1175 = vmatpush1.msra.mxu0 %v1127
  %1176 = vmatprep.subr.mxu0 0.0
  %1177 = vmatpush1.msra.mxu0 %v1126
  %1178 = vmatprep.subr.mxu0 0.0
  %1179 = vmatpush1.msra.mxu0 %v1125
  %1180 = vmatprep.subr.mxu0 0.0
  %1181 = vmatpush2.msra.mxu0 0.0
  %1182 = vmatprep.subr.mxu0 0.0
  %1183 = vmatpush2.msra.mxu0 0.0
  %1184 = vmatprep.subr.mxu0 0.0
  %1185 = vmatpush2.msra.mxu0 0.0
  %1186 = vmatprep.subr.mxu0 0.0
  %1187 = vmatpush2.msra.mxu0 0.0
  %1188 = vmatprep.subr.mxu0 0.0
  %1189 = vmatpush2.msra.mxu0 0.0
  %1190 = vmatprep.subr.mxu0 0.0
  %1191 = vmatpush2.msra.mxu0 0.0
  %1192 = vmatprep.subr.mxu0 0.0
  %1193 = vmatpush2.msra.mxu0 0.0
  %1194 = vmatprep.subr.mxu0 0.0
  %1195 = vmatpush2.msra.mxu0 0.0
  %1196 = vmatprep.subr.mxu0 0.0
  %1197 = vmatpush2.msra.mxu0 0.0
  %1198 = vmatprep.subr.mxu0 0.0
  %1199 = vmatpush2.msra.mxu0 0.0
  %1200 = vmatprep.subr.mxu0 0.0
  %1201 = vmatpush2.msra.mxu0 0.0
  %1202 = vmatprep.subr.mxu0 0.0
  %1203 = vmatpush2.msra.mxu0 0.0
  %1204 = vmatprep.subr.mxu0 0.0
  %1205 = vmatpush2.msra.mxu0 0.0
  %1206 = vmatprep.subr.mxu0 0.0
  %1207 = vmatpush2.msra.mxu0 0.0
  %1208 = vmatprep.subr.mxu0 0.0
  %1209 = vmatpush2.msra.mxu0 0.0
  %1210 = vmatprep.subr.mxu0 0.0
  %1211 = vmatpush2.msra.mxu0 0.0
  %1212 = vmatprep.mubr.f32.mxu0 0.0
  %1213 = vmatmul.mubr.f32.gmra.mxu0 %v1117
  %v1214 = vpop.f32.mrf.mxu0
  %v1215 = vadd.f32 %v1146, %v1214
  %v1216 = vpop.f32.mrf.mxu0
  %1217 = vmatprep.mubr.f32.mxu0 0.0
  %1218 = vmatmul.mubr.f32.gmra.mxu0 %v1118
  %v1219 = vpop.f32.mrf.mxu0
  %v1220 = vadd.f32 %v1146, %v1219
  %v1221 = vpop.f32.mrf.mxu0
  %1222 = vmatprep.mubr.f32.mxu0 0.0
  %1223 = vmatmul.mubr.f32.gmra.mxu0 %v1119
  %v1224 = vpop.f32.mrf.mxu0
  %v1225 = vadd.f32 %v1146, %v1224
  %v1226 = vpop.f32.mrf.mxu0
  %1227 = vmatprep.mubr.f32.mxu0 0.0
  %1228 = vmatmul.mubr.f32.gmra.mxu0 %v1120
  %v1229 = vpop.f32.mrf.mxu0
  %v1230 = vadd.f32 %v1146, %v1229
  %v1231 = vpop.f32.mrf.mxu0
  %1232 = vdwg.mxu0
  %v1237 = vcombine.high %v1215, %v1215
  %v1239 = vunpack.c.l.s4 1966171168
  %v1240 = vunpack.c.0.s8 %v1239
  %v1241 = vlaneseq
  %v1242 = vshrl.u32 %v1241, 7
  %v1243 = vsub.s32 %v1240, %v1242
  %v1244 = vrot.slane %v1215, %v1243
  %v1246 = vunpack.c.l.s4 1966171168
  %v1247 = vunpack.c.0.s8 %v1246
  %v1248 = vlaneseq
  %v1249 = vshrl.u32 %v1248, 7
  %v1250 = vsub.s32 %v1247, %v1249
  %v1251 = vrot.slane %v1237, %v1250
  %v1252 = vcombine.high %v1244, %v1244
  %v1253 = vcombine.high %v1251, %v1251
  %v1255 = vunpack.c.l.s4 1966171168
  %v1256 = vunpack.c.0.s8 %v1255
  %v1257 = vlaneseq
  %v1258 = vshrl.u32 %v1257, 7
  %v1259 = vsub.s32 %v1256, %v1258
  %v1260 = vrot.slane %v1244, %v1259
  %v1262 = vunpack.c.l.s4 1966171168
  %v1263 = vunpack.c.0.s8 %v1262
  %v1264 = vlaneseq
  %v1265 = vshrl.u32 %v1264, 7
  %v1266 = vsub.s32 %v1263, %v1265
  %v1267 = vrot.slane %v1251, %v1266
  %v1269 = vunpack.c.l.s4 1966171168
  %v1270 = vunpack.c.0.s8 %v1269
  %v1271 = vlaneseq
  %v1272 = vshrl.u32 %v1271, 7
  %v1273 = vsub.s32 %v1270, %v1272
  %v1274 = vrot.slane %v1252, %v1273
  %v1276 = vunpack.c.l.s4 1966171168
  %v1277 = vunpack.c.0.s8 %v1276
  %v1278 = vlaneseq
  %v1279 = vshrl.u32 %v1278, 7
  %v1280 = vsub.s32 %v1277, %v1279
  %v1281 = vrot.slane %v1253, %v1280
  %v1282 = vcombine.high %v1260, %v1260
  %v1283 = vcombine.high %v1267, %v1267
  %v1284 = vcombine.high %v1274, %v1274
  %v1285 = vcombine.high %v1281, %v1281
  %v1286 = vcombine.high %v1220, %v1220
  %v1288 = vunpack.c.l.s4 1966171168
  %v1289 = vunpack.c.0.s8 %v1288
  %v1290 = vlaneseq
  %v1291 = vshrl.u32 %v1290, 7
  %v1292 = vsub.s32 %v1289, %v1291
  %v1293 = vrot.slane %v1220, %v1292
  %v1295 = vunpack.c.l.s4 1966171168
  %v1296 = vunpack.c.0.s8 %v1295
  %v1297 = vlaneseq
  %v1298 = vshrl.u32 %v1297, 7
  %v1299 = vsub.s32 %v1296, %v1298
  %v1300 = vrot.slane %v1286, %v1299
  %v1301 = vcombine.high %v1293, %v1293
  %v1302 = vcombine.high %v1300, %v1300
  %v1304 = vunpack.c.l.s4 1966171168
  %v1305 = vunpack.c.0.s8 %v1304
  %v1306 = vlaneseq
  %v1307 = vshrl.u32 %v1306, 7
  %v1308 = vsub.s32 %v1305, %v1307
  %v1309 = vrot.slane %v1293, %v1308
  %v1311 = vunpack.c.l.s4 1966171168
  %v1312 = vunpack.c.0.s8 %v1311
  %v1313 = vlaneseq
  %v1314 = vshrl.u32 %v1313, 7
  %v1315 = vsub.s32 %v1312, %v1314
  %v1316 = vrot.slane %v1300, %v1315
  %v1318 = vunpack.c.l.s4 1966171168
  %v1319 = vunpack.c.0.s8 %v1318
  %v1320 = vlaneseq
  %v1321 = vshrl.u32 %v1320, 7
  %v1322 = vsub.s32 %v1319, %v1321
  %v1323 = vrot.slane %v1301, %v1322
  %v1325 = vunpack.c.l.s4 1966171168
  %v1326 = vunpack.c.0.s8 %v1325
  %v1327 = vlaneseq
  %v1328 = vshrl.u32 %v1327, 7
  %v1329 = vsub.s32 %v1326, %v1328
  %v1330 = vrot.slane %v1302, %v1329
  %v1331 = vcombine.high %v1309, %v1309
  %v1332 = vcombine.high %v1316, %v1316
  %v1333 = vcombine.high %v1323, %v1323
  %v1334 = vcombine.high %v1330, %v1330
  %v1335 = vcombine.high %v1225, %v1225
  %v1337 = vunpack.c.l.s4 1966171168
  %v1338 = vunpack.c.0.s8 %v1337
  %v1339 = vlaneseq
  %v1340 = vshrl.u32 %v1339, 7
  %v1341 = vsub.s32 %v1338, %v1340
  %v1342 = vrot.slane %v1225, %v1341
  %v1344 = vunpack.c.l.s4 1966171168
  %v1345 = vunpack.c.0.s8 %v1344
  %v1346 = vlaneseq
  %v1347 = vshrl.u32 %v1346, 7
  %v1348 = vsub.s32 %v1345, %v1347
  %v1349 = vrot.slane %v1335, %v1348
  %v1350 = vcombine.high %v1342, %v1342
  %v1351 = vcombine.high %v1349, %v1349
  %v1353 = vunpack.c.l.s4 1966171168
  %v1354 = vunpack.c.0.s8 %v1353
  %v1355 = vlaneseq
  %v1356 = vshrl.u32 %v1355, 7
  %v1357 = vsub.s32 %v1354, %v1356
  %v1358 = vrot.slane %v1342, %v1357
  %v1360 = vunpack.c.l.s4 1966171168
  %v1361 = vunpack.c.0.s8 %v1360
  %v1362 = vlaneseq
  %v1363 = vshrl.u32 %v1362, 7
  %v1364 = vsub.s32 %v1361, %v1363
  %v1365 = vrot.slane %v1349, %v1364
  %v1367 = vunpack.c.l.s4 1966171168
  %v1368 = vunpack.c.0.s8 %v1367
  %v1369 = vlaneseq
  %v1370 = vshrl.u32 %v1369, 7
  %v1371 = vsub.s32 %v1368, %v1370
  %v1372 = vrot.slane %v1350, %v1371
  %v1374 = vunpack.c.l.s4 1966171168
  %v1375 = vunpack.c.0.s8 %v1374
  %v1376 = vlaneseq
  %v1377 = vshrl.u32 %v1376, 7
  %v1378 = vsub.s32 %v1375, %v1377
  %v1379 = vrot.slane %v1351, %v1378
  %v1380 = vcombine.high %v1358, %v1358
  %v1381 = vcombine.high %v1365, %v1365
  %v1382 = vcombine.high %v1372, %v1372
  %v1383 = vcombine.high %v1379, %v1379
  %v1384 = vcombine.high %v1230, %v1230
  %v1386 = vunpack.c.l.s4 1966171168
  %v1387 = vunpack.c.0.s8 %v1386
  %v1388 = vlaneseq
  %v1389 = vshrl.u32 %v1388, 7
  %v1390 = vsub.s32 %v1387, %v1389
  %v1391 = vrot.slane %v1230, %v1390
  %v1393 = vunpack.c.l.s4 1966171168
  %v1394 = vunpack.c.0.s8 %v1393
  %v1395 = vlaneseq
  %v1396 = vshrl.u32 %v1395, 7
  %v1397 = vsub.s32 %v1394, %v1396
  %v1398 = vrot.slane %v1384, %v1397
  %v1399 = vcombine.high %v1391, %v1391
  %v1400 = vcombine.high %v1398, %v1398
  %v1402 = vunpack.c.l.s4 1966171168
  %v1403 = vunpack.c.0.s8 %v1402
  %v1404 = vlaneseq
  %v1405 = vshrl.u32 %v1404, 7
  %v1406 = vsub.s32 %v1403, %v1405
  %v1407 = vrot.slane %v1391, %v1406
  %v1409 = vunpack.c.l.s4 1966171168
  %v1410 = vunpack.c.0.s8 %v1409
  %v1411 = vlaneseq
  %v1412 = vshrl.u32 %v1411, 7
  %v1413 = vsub.s32 %v1410, %v1412
  %v1414 = vrot.slane %v1398, %v1413
  %v1416 = vunpack.c.l.s4 1966171168
  %v1417 = vunpack.c.0.s8 %v1416
  %v1418 = vlaneseq
  %v1419 = vshrl.u32 %v1418, 7
  %v1420 = vsub.s32 %v1417, %v1419
  %v1421 = vrot.slane %v1399, %v1420
  %v1423 = vunpack.c.l.s4 1966171168
  %v1424 = vunpack.c.0.s8 %v1423
  %v1425 = vlaneseq
  %v1426 = vshrl.u32 %v1425, 7
  %v1427 = vsub.s32 %v1424, %v1426
  %v1428 = vrot.slane %v1400, %v1427
  %v1429 = vcombine.high %v1407, %v1407
  %v1430 = vcombine.high %v1414, %v1414
  %v1431 = vcombine.high %v1421, %v1421
  %v1432 = vcombine.high %v1428, %v1428
  %1465 = vst [vmem:[%s11] sm:$0x1] %v1260
  %1466 = vst [vmem:[%s11 + $0x2] sm:$0x1] %v1274
  %1467 = vst [vmem:[%s11 + $0x4] sm:$0x1] %v1282
  %1468 = vst [vmem:[%s11 + $0x6] sm:$0x1] %v1284
  %1469 = vst [vmem:[%s11 + $0x8] sm:$0x1] %v1267
  %1470 = vst [vmem:[%s11 + $0xa] sm:$0x1] %v1281
  %1471 = vst [vmem:[%s11 + $0xc] sm:$0x1] %v1283
  %1472 = vst [vmem:[%s11 + $0xe] sm:$0x1] %v1285
  %1473 = vst [vmem:[%s11 + $0x10] sm:$0x1] %v1309
  %1474 = vst [vmem:[%s11 + $0x12] sm:$0x1] %v1323
  %1475 = vst [vmem:[%s11 + $0x14] sm:$0x1] %v1331
  %1476 = vst [vmem:[%s11 + $0x16] sm:$0x1] %v1333
  %1477 = vst [vmem:[%s11 + $0x18] sm:$0x1] %v1316
  %1478 = vst [vmem:[%s11 + $0x1a] sm:$0x1] %v1330
  %1479 = vst [vmem:[%s11 + $0x1c] sm:$0x1] %v1332
  %1480 = vst [vmem:[%s11 + $0x1e] sm:$0x1] %v1334
  %1481 = vst [vmem:[%s11 + $0x20] sm:$0x1] %v1358
  %1482 = vst [vmem:[%s11 + $0x22] sm:$0x1] %v1372
  %1483 = vst [vmem:[%s11 + $0x24] sm:$0x1] %v1380
  %1484 = vst [vmem:[%s11 + $0x26] sm:$0x1] %v1382
  %1485 = vst [vmem:[%s11 + $0x28] sm:$0x1] %v1365
  %1486 = vst [vmem:[%s11 + $0x2a] sm:$0x1] %v1379
  %1487 = vst [vmem:[%s11 + $0x2c] sm:$0x1] %v1381
  %1488 = vst [vmem:[%s11 + $0x2e] sm:$0x1] %v1383
  %1489 = vst [vmem:[%s11 + $0x30] sm:$0x1] %v1407
  %1490 = vst [vmem:[%s11 + $0x32] sm:$0x1] %v1421
  %1491 = vst [vmem:[%s11 + $0x34] sm:$0x1] %v1429
  %1492 = vst [vmem:[%s11 + $0x36] sm:$0x1] %v1431
  %1493 = vst [vmem:[%s11 + $0x38] sm:$0x1] %v1414
  %1494 = vst [vmem:[%s11 + $0x3a] sm:$0x1] %v1428
  %1495 = vst [vmem:[%s11 + $0x3c] sm:$0x1] %v1430
  %1496 = vst [vmem:[%s11 + $0x3e] sm:$0x1] %v1432
  %1497 = vst [vmem:[%s11 + $0x1] sm:$0x1] %v1260
  %1498 = vst [vmem:[%s11 + $0x3] sm:$0x1] %v1274
  %1499 = vst [vmem:[%s11 + $0x5] sm:$0x1] %v1282
  %1500 = vst [vmem:[%s11 + $0x7] sm:$0x1] %v1284
  %1501 = vst [vmem:[%s11 + $0x9] sm:$0x1] %v1267
  %1502 = vst [vmem:[%s11 + $0xb] sm:$0x1] %v1281
  %1503 = vst [vmem:[%s11 + $0xd] sm:$0x1] %v1283
  %1504 = vst [vmem:[%s11 + $0xf] sm:$0x1] %v1285
  %1505 = vst [vmem:[%s11 + $0x11] sm:$0x1] %v1309
  %1506 = vst [vmem:[%s11 + $0x13] sm:$0x1] %v1323
  %1507 = vst [vmem:[%s11 + $0x15] sm:$0x1] %v1331
  %1508 = vst [vmem:[%s11 + $0x17] sm:$0x1] %v1333
  %1509 = vst [vmem:[%s11 + $0x19] sm:$0x1] %v1316
  %1510 = vst [vmem:[%s11 + $0x1b] sm:$0x1] %v1330
  %1511 = vst [vmem:[%s11 + $0x1d] sm:$0x1] %v1332
  %1512 = vst [vmem:[%s11 + $0x1f] sm:$0x1] %v1334
  %1513 = vst [vmem:[%s11 + $0x21] sm:$0x1] %v1358
  %1514 = vst [vmem:[%s11 + $0x23] sm:$0x1] %v1372
  %1515 = vst [vmem:[%s11 + $0x25] sm:$0x1] %v1380
  %1516 = vst [vmem:[%s11 + $0x27] sm:$0x1] %v1382
  %1517 = vst [vmem:[%s11 + $0x29] sm:$0x1] %v1365
  %1518 = vst [vmem:[%s11 + $0x2b] sm:$0x1] %v1379
  %1519 = vst [vmem:[%s11 + $0x2d] sm:$0x1] %v1381
  %1520 = vst [vmem:[%s11 + $0x2f] sm:$0x1] %v1383
  %1521 = vst [vmem:[%s11 + $0x31] sm:$0x1] %v1407
  %1522 = vst [vmem:[%s11 + $0x33] sm:$0x1] %v1421
  %1523 = vst [vmem:[%s11 + $0x35] sm:$0x1] %v1429
  %1524 = vst [vmem:[%s11 + $0x37] sm:$0x1] %v1431
  %1525 = vst [vmem:[%s11 + $0x39] sm:$0x1] %v1414
  %1526 = vst [vmem:[%s11 + $0x3b] sm:$0x1] %v1428
  %1527 = vst [vmem:[%s11 + $0x3d] sm:$0x1] %v1430
  %1528 = vst [vmem:[%s11 + $0x3f] sm:$0x1] %v1432
  // Predicated region
  $region42: #{decoder_block_forward.1} parent=0 // pred_check
    _
  $region43: #{decoder_block_forward.1} parent=0 // pred_check_branch
    %1530 = sbr.rel (0) target = $region45
  $region44: #{decoder_block_forward.1} parent=0 // pred_region
    _
  $region45: #{decoder_block_forward.1} parent=0 // pred_fallthru
    _
  // Predicated region
  $region46: #{decoder_block_forward.1} parent=0 // pred_check
    _
  $region47: #{decoder_block_forward.1} parent=0 // pred_check_branch
    %1532 = sbr.rel (0) target = $region49
  $region48: #{decoder_block_forward.1} parent=0 // pred_region
    _
  $region49: #{decoder_block_forward.1} parent=0 // pred_fallthru
    _
  // Predicated region
  $region50: #{decoder_block_forward.1} parent=0 // pred_check
    _
  $region51: #{decoder_block_forward.1} parent=0 // pred_check_branch
    %1534 = sbr.rel (0) target = $region53
  $region52: #{decoder_block_forward.1} parent=0 // pred_region
    _
  $region53: #{decoder_block_forward.1} parent=0 // pred_fallthru
    _
  // Predicated region
  $region54: #{decoder_block_forward.1} parent=0 // pred_check
    _
  $region55: #{decoder_block_forward.1} parent=0 // pred_check_branch
    %1536 = sbr.rel (0) target = $region57
  $region56: #{decoder_block_forward.1} parent=0 // pred_region
    _
  $region57: #{decoder_block_forward.1} parent=0 // pred_fallthru
    _

</llo_original>
